<compile_context>
chip_gen: v7x
topology: tpu7x:2x2x1
jax: 0.10.0
libtpu: 0.0.40
codegen_flags: <defaults>
</compile_context>

<pallas_src>
import jax
import jax.numpy as jnp
from jax.experimental import pallas as pl
from jax.experimental.pallas import tpu as pltpu

B_PAD = 8        # sublane width: pad batch 2 -> 8 so every per-step op is vreg-aligned
FC_LANES = 128   # lane-dense FC head output; real O columns sliced in the wrapper


# ------------------------------- Pallas kernel --------------------------------
def _make_kernel(T, H, B_pad):
    def kernel(x_ref, wih1_ref, b1_ref, wbig_ref, whh2_ref, b2_ref,
               fcw_ref, fcb_ref, out_ref):
        # ---- Phase 1: hoisted layer-1 input projection for the whole sequence.
        # x_ref is time-major, batch-padded, flattened: (T*B_pad, IN).
        xproj = (jnp.dot(x_ref[...], wih1_ref[...],
                         preferred_element_type=jnp.float32)
                 + b1_ref[...])                                   # (T*B_pad, 4H)

        w_big = wbig_ref[...]      # (H, 8H) = [W_hh1^T | W_ih2^T]
        w_hh2 = whh2_ref[...]      # (H, 4H)
        b2 = b2_ref[...]           # (1, 4H)

        def cell(gates, c):
            # PyTorch gate order: i, f, g, o.
            sig = jax.nn.sigmoid(gates)
            i = sig[:, 0 * H:1 * H]
            f = sig[:, 1 * H:2 * H]
            o = sig[:, 3 * H:4 * H]
            g = jnp.tanh(gates[:, 2 * H:3 * H])
            c_new = f * c + i * g
            return o * jnp.tanh(c_new), c_new

        zeros = jnp.zeros((B_pad, H), jnp.float32)   # h0 = c0 = 0 (as in PyTorch)
        c1 = zeros
        h2 = zeros
        c2 = zeros

        # t = 0, layer 1 only: h1_{-1} = 0 so the recurrent term vanishes.
        h1, c1 = cell(xproj[0:B_pad, :], c1)

        # ---- Phase 2: wavefront recurrence, fully unrolled (T static & small).
        # Iteration s: layer-1 for t=s and layer-2 for t=s-1, both using only
        # h1_{s-1} / h2_{s-2}; the two dots are independent within a step, so
        # each chain sees ONE dependent MXU push per step, and `big` fills the
        # full 256-wide MXU.
        for s in range(1, T + 1):
            big = jnp.dot(h1, w_big,
                          preferred_element_type=jnp.float32)     # (B_pad, 8H)
            # Layer 2, time t = s-1.
            g2 = (big[:, 4 * H:]
                  + jnp.dot(h2, w_hh2, preferred_element_type=jnp.float32)
                  + b2)
            h2, c2 = cell(g2, c2)
            # Layer 1, time t = s.
            if s < T:
                g1 = xproj[s * B_pad:(s + 1) * B_pad, :] + big[:, :4 * H]
                h1, c1 = cell(g1, c1)

        # Dropout(p=0.2) on the last hidden state is identity at inference.
        # TODO(synk): training-mode (stochastic) dropout not implemented.

        # ---- Phase 3: lane-dense FC head; single unmasked (B_pad, 128) store.
        out_ref[...] = (jnp.dot(h2, fcw_ref[...],
                                preferred_element_type=jnp.float32)
                        + fcb_ref[...])

    return kernel


# ------------------------------ Fused forward ---------------------------------
def lstm_model_forward(x, packed):
    """x: (B, T, IN) batch_first, exactly like the PyTorch module."""
    B, T, IN = x.shape
    H = packed["w_hh2_t"].shape[0]
    O = packed["out_dim"]
    assert B <= B_PAD

    # One tiny wrapper op: time-major, batch padded to the 8-sublane width,
    # flattened so the hoisted projection is one MXU matmul and every per-step
    # slice starts at a sublane-aligned offset t*8.
    x_tm = jnp.transpose(x, (1, 0, 2)).astype(jnp.float32)         # (T, B, IN)
    x_pad = jnp.pad(x_tm, ((0, 0), (0, B_PAD - B), (0, 0)))        # (T, 8, IN)
    x_flat = x_pad.reshape(T * B_PAD, IN)

    vmem = pltpu.MemorySpace.VMEM
    out_pad = pl.pallas_call(
        _make_kernel(T, H, B_PAD),
        out_shape=jax.ShapeDtypeStruct((B_PAD, FC_LANES), jnp.float32),
        in_specs=[pl.BlockSpec(memory_space=vmem)] * 8,
        out_specs=pl.BlockSpec(memory_space=vmem),
    )(x_flat,
      packed["w_ih1_t"], packed["b1"],
      packed["w_big"], packed["w_hh2_t"], packed["b2"],
      packed["fc_w_pad"], packed["fc_b_pad"])

    # Slice off batch padding and FC lane padding.
    return out_pad[:B, :O]


# --------------------------- Pure-JAX reference --------------------------------
def lstm_model_reference(x, raw):
    B, T, _ = x.shape
    H = raw["w_hh_l0"].shape[1]
    hp = jax.lax.Precision.HIGHEST

    def run_layer(seq, w_ih, w_hh, b_ih, b_hh):
        h = jnp.zeros((B, H), jnp.float32)
        c = jnp.zeros((B, H), jnp.float32)
        outs = []
        for t in range(T):
            gates = (jnp.dot(seq[:, t, :], w_ih.T, precision=hp)
                     + jnp.dot(h, w_hh.T, precision=hp) + b_ih + b_hh)
            i = jax.nn.sigmoid(gates[:, 0 * H:1 * H])
            f = jax.nn.sigmoid(gates[:, 1 * H:2 * H])
            g = jnp.tanh(gates[:, 2 * H:3 * H])
            o = jax.nn.sigmoid(gates[:, 3 * H:4 * H])
            c = f * c + i * g
            h = o * jnp.tanh(c)
            outs.append(h)
        return jnp.stack(outs, axis=1)                              # (B, T, H)

    h1_seq = run_layer(x, raw["w_ih_l0"], raw["w_hh_l0"],
                       raw["b_ih_l0"], raw["b_hh_l0"])
    h2_seq = run_layer(h1_seq, raw["w_ih_l1"], raw["w_hh_l1"],
                       raw["b_ih_l1"], raw["b_hh_l1"])
    h_last = h2_seq[:, -1, :]
    return jnp.dot(h_last, raw["fc_w"].T, precision=hp) + raw["fc_b"]


# ---------------------------- Deterministic params -----------------------------
def init_raw_params(key, input_size, hidden_size, num_layers, output_size):
    assert num_layers == 2, "this fused kernel implements the 2-layer module"
    H = hidden_size
    k = 1.0 / float(H) ** 0.5
    ks = jax.random.split(key, 10)

    def u(kk, shape):
        return jax.random.uniform(kk, shape, jnp.float32, -k, k)

    return {
        "w_ih_l0": u(ks[0], (4 * H, input_size)),
        "w_hh_l0": u(ks[1], (4 * H, H)),
        "b_ih_l0": u(ks[2], (4 * H,)),
        "b_hh_l0": u(ks[3], (4 * H,)),
        "w_ih_l1": u(ks[4], (4 * H, H)),
        "w_hh_l1": u(ks[5], (4 * H, H)),
        "b_ih_l1": u(ks[6], (4 * H,)),
        "b_hh_l1": u(ks[7], (4 * H,)),
        "fc_w":    u(ks[8], (output_size, H)),
        "fc_b":    u(ks[9], (output_size,)),
    }


def pack_params(raw):
    """Repack PyTorch-layout weights into the kernel-friendly layout (once)."""
    H = raw["w_hh_l0"].shape[1]
    O = int(raw["fc_w"].shape[0])
    fc_w_pad = jnp.zeros((H, FC_LANES), jnp.float32).at[:, :O].set(raw["fc_w"].T)
    fc_b_pad = jnp.zeros((1, FC_LANES), jnp.float32).at[0, :O].set(raw["fc_b"])
    return {
        "w_ih1_t": raw["w_ih_l0"].T,                                      # (IN, 4H)
        "b1": (raw["b_ih_l0"] + raw["b_hh_l0"]).reshape(1, 4 * H),        # (1, 4H)
        # [W_hh1^T | W_ih2^T] side by side -> one 256-wide MXU push per step.
        "w_big": jnp.concatenate([raw["w_hh_l0"].T, raw["w_ih_l1"].T],
                                 axis=1),                                 # (H, 8H)
        "w_hh2_t": raw["w_hh_l1"].T,                                      # (H, 4H)
        "b2": (raw["b_ih_l1"] + raw["b_hh_l1"]).reshape(1, 4 * H),        # (1, 4H)
        "fc_w_pad": fc_w_pad,                                             # (H, 128)
        "fc_b_pad": fc_b_pad,                                             # (1, 128)
        "out_dim": O,
    }


if __name__ == "__main__":
    # Small shapes consistent with the module's forward:
    # batch=2, seq=8, input_size=64, hidden=32, num_layers=2, output=2
    B, T, IN, H, L, O = 2, 8, 64, 32, 2, 2

    root = jax.random.PRNGKey(0)
    kx, kp = jax.random.split(root)
    x = jax.random.normal(kx, (B, T, IN), dtype=jnp.float32)
    raw = init_raw_params(kp, IN, H, L, O)
    packed = pack_params(raw)

    out = lstm_model_forward(x, packed)
    jax.block_until_ready(out)
    assert out.shape == (B, O), out.shape

    ref = lstm_model_reference(x, raw)
    max_err = float(jnp.max(jnp.abs(out - ref)))
    assert jnp.allclose(out, ref, atol=2e-3, rtol=2e-3), ("mismatch", max_err)

    print("KERNEL_OK")
</pallas_src>

<mosaic_0001>
module attributes {stable_mosaic.version = 11 : i64} {
  func.func @kernel(%arg0: memref<64x64xf32, #tpu.memory_space<vmem>>, %arg1: memref<64x128xf32, #tpu.memory_space<vmem>>, %arg2: memref<1x128xf32, #tpu.memory_space<vmem>>, %arg3: memref<32x256xf32, #tpu.memory_space<vmem>>, %arg4: memref<32x128xf32, #tpu.memory_space<vmem>>, %arg5: memref<1x128xf32, #tpu.memory_space<vmem>>, %arg6: memref<32x128xf32, #tpu.memory_space<vmem>>, %arg7: memref<1x128xf32, #tpu.memory_space<vmem>>, %arg8: memref<8x128xf32, #tpu.memory_space<vmem>>) attributes {dimension_semantics = [], scalar_prefetch = 0 : i64, scratch_operands = 0 : i64, tpu.core_type = #tpu.core_type<tc>} {
    %c0 = arith.constant 0 : index
    %c0_0 = arith.constant 0 : index
    %0 = vector.load %arg0[%c0, %c0_0] : memref<64x64xf32, #tpu.memory_space<vmem>>, vector<64x64xf32>
    %c0_1 = arith.constant 0 : index
    %c0_2 = arith.constant 0 : index
    %1 = vector.load %arg1[%c0_1, %c0_2] : memref<64x128xf32, #tpu.memory_space<vmem>>, vector<64x128xf32>
    %cst = arith.constant dense<0.000000e+00> : vector<64x128xf32>
    %2 = tpu.matmul %0, %1, %cst {dimension_numbers = #tpu.dot_dimension_numbers<[1], [0], [0], [1], [0, 0, 1, 1], [], []>} : vector<64x64xf32>, vector<64x128xf32>, vector<64x128xf32> -> vector<64x128xf32>
    %c0_3 = arith.constant 0 : index
    %c0_4 = arith.constant 0 : index
    %3 = vector.load %arg2[%c0_3, %c0_4] : memref<1x128xf32, #tpu.memory_space<vmem>>, vector<1x128xf32>
    %4 = vector.broadcast %3 : vector<1x128xf32> to vector<64x128xf32>
    %5 = arith.addf %2, %4 : vector<64x128xf32>
    %c0_5 = arith.constant 0 : index
    %c0_6 = arith.constant 0 : index
    %6 = vector.load %arg3[%c0_5, %c0_6] : memref<32x256xf32, #tpu.memory_space<vmem>>, vector<32x256xf32>
    %c0_7 = arith.constant 0 : index
    %c0_8 = arith.constant 0 : index
    %7 = vector.load %arg4[%c0_7, %c0_8] : memref<32x128xf32, #tpu.memory_space<vmem>>, vector<32x128xf32>
    %c0_9 = arith.constant 0 : index
    %c0_10 = arith.constant 0 : index
    %8 = vector.load %arg5[%c0_9, %c0_10] : memref<1x128xf32, #tpu.memory_space<vmem>>, vector<1x128xf32>
    %cst_11 = arith.constant 0.000000e+00 : f32
    %9 = vector.broadcast %cst_11 : f32 to vector<8x32xf32>
    %10 = vector.extract_strided_slice %5 {offsets = [0, 0], sizes = [8, 128], strides = [1, 1]} : vector<64x128xf32> to vector<8x128xf32>
    %11 = arith.negf %10 : vector<8x128xf32>
    %12 = math.exp %11 : vector<8x128xf32>
    %cst_12 = arith.constant 1.000000e+00 : f32
    %13 = vector.broadcast %cst_12 : f32 to vector<8x128xf32>
    %14 = arith.addf %13, %12 : vector<8x128xf32>
    %15 = arith.divf %13, %14 : vector<8x128xf32>
    %16 = vector.extract_strided_slice %15 {offsets = [0, 0], sizes = [8, 32], strides = [1, 1]} : vector<8x128xf32> to vector<8x32xf32>
    %17 = vector.extract_strided_slice %15 {offsets = [0, 32], sizes = [8, 32], strides = [1, 1]} : vector<8x128xf32> to vector<8x32xf32>
    %18 = vector.extract_strided_slice %15 {offsets = [0, 96], sizes = [8, 32], strides = [1, 1]} : vector<8x128xf32> to vector<8x32xf32>
    %19 = vector.extract_strided_slice %10 {offsets = [0, 64], sizes = [8, 32], strides = [1, 1]} : vector<8x128xf32> to vector<8x32xf32>
    %20 = math.tanh %19 : vector<8x32xf32>
    %21 = arith.mulf %17, %9 : vector<8x32xf32>
    %22 = arith.mulf %16, %20 : vector<8x32xf32>
    %23 = arith.addf %21, %22 : vector<8x32xf32>
    %24 = math.tanh %23 : vector<8x32xf32>
    %25 = arith.mulf %18, %24 : vector<8x32xf32>
    %cst_13 = arith.constant dense<0.000000e+00> : vector<8x256xf32>
    %26 = tpu.matmul %25, %6, %cst_13 {dimension_numbers = #tpu.dot_dimension_numbers<[1], [0], [0], [1], [0, 0, 1, 1], [], []>} : vector<8x32xf32>, vector<32x256xf32>, vector<8x256xf32> -> vector<8x256xf32>
    %27 = vector.extract_strided_slice %26 {offsets = [0, 128], sizes = [8, 128], strides = [1, 1]} : vector<8x256xf32> to vector<8x128xf32>
    %cst_14 = arith.constant dense<0.000000e+00> : vector<8x128xf32>
    %28 = tpu.matmul %9, %7, %cst_14 {dimension_numbers = #tpu.dot_dimension_numbers<[1], [0], [0], [1], [0, 0, 1, 1], [], []>} : vector<8x32xf32>, vector<32x128xf32>, vector<8x128xf32> -> vector<8x128xf32>
    %29 = arith.addf %27, %28 : vector<8x128xf32>
    %30 = vector.broadcast %8 : vector<1x128xf32> to vector<8x128xf32>
    %31 = arith.addf %29, %30 : vector<8x128xf32>
    %32 = arith.negf %31 : vector<8x128xf32>
    %33 = math.exp %32 : vector<8x128xf32>
    %cst_15 = arith.constant 1.000000e+00 : f32
    %34 = vector.broadcast %cst_15 : f32 to vector<8x128xf32>
    %35 = arith.addf %34, %33 : vector<8x128xf32>
    %36 = arith.divf %34, %35 : vector<8x128xf32>
    %37 = vector.extract_strided_slice %36 {offsets = [0, 0], sizes = [8, 32], strides = [1, 1]} : vector<8x128xf32> to vector<8x32xf32>
    %38 = vector.extract_strided_slice %36 {offsets = [0, 32], sizes = [8, 32], strides = [1, 1]} : vector<8x128xf32> to vector<8x32xf32>
    %39 = vector.extract_strided_slice %36 {offsets = [0, 96], sizes = [8, 32], strides = [1, 1]} : vector<8x128xf32> to vector<8x32xf32>
    %40 = vector.extract_strided_slice %31 {offsets = [0, 64], sizes = [8, 32], strides = [1, 1]} : vector<8x128xf32> to vector<8x32xf32>
    %41 = math.tanh %40 : vector<8x32xf32>
    %42 = arith.mulf %38, %9 : vector<8x32xf32>
    %43 = arith.mulf %37, %41 : vector<8x32xf32>
    %44 = arith.addf %42, %43 : vector<8x32xf32>
    %45 = math.tanh %44 : vector<8x32xf32>
    %46 = arith.mulf %39, %45 : vector<8x32xf32>
    %47 = vector.extract_strided_slice %5 {offsets = [8, 0], sizes = [8, 128], strides = [1, 1]} : vector<64x128xf32> to vector<8x128xf32>
    %48 = vector.extract_strided_slice %26 {offsets = [0, 0], sizes = [8, 128], strides = [1, 1]} : vector<8x256xf32> to vector<8x128xf32>
    %49 = arith.addf %47, %48 : vector<8x128xf32>
    %50 = arith.negf %49 : vector<8x128xf32>
    %51 = math.exp %50 : vector<8x128xf32>
    %cst_16 = arith.constant 1.000000e+00 : f32
    %52 = vector.broadcast %cst_16 : f32 to vector<8x128xf32>
    %53 = arith.addf %52, %51 : vector<8x128xf32>
    %54 = arith.divf %52, %53 : vector<8x128xf32>
    %55 = vector.extract_strided_slice %54 {offsets = [0, 0], sizes = [8, 32], strides = [1, 1]} : vector<8x128xf32> to vector<8x32xf32>
    %56 = vector.extract_strided_slice %54 {offsets = [0, 32], sizes = [8, 32], strides = [1, 1]} : vector<8x128xf32> to vector<8x32xf32>
    %57 = vector.extract_strided_slice %54 {offsets = [0, 96], sizes = [8, 32], strides = [1, 1]} : vector<8x128xf32> to vector<8x32xf32>
    %58 = vector.extract_strided_slice %49 {offsets = [0, 64], sizes = [8, 32], strides = [1, 1]} : vector<8x128xf32> to vector<8x32xf32>
    %59 = math.tanh %58 : vector<8x32xf32>
    %60 = arith.mulf %56, %23 : vector<8x32xf32>
    %61 = arith.mulf %55, %59 : vector<8x32xf32>
    %62 = arith.addf %60, %61 : vector<8x32xf32>
    %63 = math.tanh %62 : vector<8x32xf32>
    %64 = arith.mulf %57, %63 : vector<8x32xf32>
    %cst_17 = arith.constant dense<0.000000e+00> : vector<8x256xf32>
    %65 = tpu.matmul %64, %6, %cst_17 {dimension_numbers = #tpu.dot_dimension_numbers<[1], [0], [0], [1], [0, 0, 1, 1], [], []>} : vector<8x32xf32>, vector<32x256xf32>, vector<8x256xf32> -> vector<8x256xf32>
    %66 = vector.extract_strided_slice %65 {offsets = [0, 128], sizes = [8, 128], strides = [1, 1]} : vector<8x256xf32> to vector<8x128xf32>
    %cst_18 = arith.constant dense<0.000000e+00> : vector<8x128xf32>
    %67 = tpu.matmul %46, %7, %cst_18 {dimension_numbers = #tpu.dot_dimension_numbers<[1], [0], [0], [1], [0, 0, 1, 1], [], []>} : vector<8x32xf32>, vector<32x128xf32>, vector<8x128xf32> -> vector<8x128xf32>
    %68 = arith.addf %66, %67 : vector<8x128xf32>
    %69 = vector.broadcast %8 : vector<1x128xf32> to vector<8x128xf32>
    %70 = arith.addf %68, %69 : vector<8x128xf32>
    %71 = arith.negf %70 : vector<8x128xf32>
    %72 = math.exp %71 : vector<8x128xf32>
    %cst_19 = arith.constant 1.000000e+00 : f32
    %73 = vector.broadcast %cst_19 : f32 to vector<8x128xf32>
    %74 = arith.addf %73, %72 : vector<8x128xf32>
    %75 = arith.divf %73, %74 : vector<8x128xf32>
    %76 = vector.extract_strided_slice %75 {offsets = [0, 0], sizes = [8, 32], strides = [1, 1]} : vector<8x128xf32> to vector<8x32xf32>
    %77 = vector.extract_strided_slice %75 {offsets = [0, 32], sizes = [8, 32], strides = [1, 1]} : vector<8x128xf32> to vector<8x32xf32>
    %78 = vector.extract_strided_slice %75 {offsets = [0, 96], sizes = [8, 32], strides = [1, 1]} : vector<8x128xf32> to vector<8x32xf32>
    %79 = vector.extract_strided_slice %70 {offsets = [0, 64], sizes = [8, 32], strides = [1, 1]} : vector<8x128xf32> to vector<8x32xf32>
    %80 = math.tanh %79 : vector<8x32xf32>
    %81 = arith.mulf %77, %44 : vector<8x32xf32>
    %82 = arith.mulf %76, %80 : vector<8x32xf32>
    %83 = arith.addf %81, %82 : vector<8x32xf32>
    %84 = math.tanh %83 : vector<8x32xf32>
    %85 = arith.mulf %78, %84 : vector<8x32xf32>
    %86 = vector.extract_strided_slice %5 {offsets = [16, 0], sizes = [8, 128], strides = [1, 1]} : vector<64x128xf32> to vector<8x128xf32>
    %87 = vector.extract_strided_slice %65 {offsets = [0, 0], sizes = [8, 128], strides = [1, 1]} : vector<8x256xf32> to vector<8x128xf32>
    %88 = arith.addf %86, %87 : vector<8x128xf32>
    %89 = arith.negf %88 : vector<8x128xf32>
    %90 = math.exp %89 : vector<8x128xf32>
    %cst_20 = arith.constant 1.000000e+00 : f32
    %91 = vector.broadcast %cst_20 : f32 to vector<8x128xf32>
    %92 = arith.addf %91, %90 : vector<8x128xf32>
    %93 = arith.divf %91, %92 : vector<8x128xf32>
    %94 = vector.extract_strided_slice %93 {offsets = [0, 0], sizes = [8, 32], strides = [1, 1]} : vector<8x128xf32> to vector<8x32xf32>
    %95 = vector.extract_strided_slice %93 {offsets = [0, 32], sizes = [8, 32], strides = [1, 1]} : vector<8x128xf32> to vector<8x32xf32>
    %96 = vector.extract_strided_slice %93 {offsets = [0, 96], sizes = [8, 32], strides = [1, 1]} : vector<8x128xf32> to vector<8x32xf32>
    %97 = vector.extract_strided_slice %88 {offsets = [0, 64], sizes = [8, 32], strides = [1, 1]} : vector<8x128xf32> to vector<8x32xf32>
    %98 = math.tanh %97 : vector<8x32xf32>
    %99 = arith.mulf %95, %62 : vector<8x32xf32>
    %100 = arith.mulf %94, %98 : vector<8x32xf32>
    %101 = arith.addf %99, %100 : vector<8x32xf32>
    %102 = math.tanh %101 : vector<8x32xf32>
    %103 = arith.mulf %96, %102 : vector<8x32xf32>
    %cst_21 = arith.constant dense<0.000000e+00> : vector<8x256xf32>
    %104 = tpu.matmul %103, %6, %cst_21 {dimension_numbers = #tpu.dot_dimension_numbers<[1], [0], [0], [1], [0, 0, 1, 1], [], []>} : vector<8x32xf32>, vector<32x256xf32>, vector<8x256xf32> -> vector<8x256xf32>
    %105 = vector.extract_strided_slice %104 {offsets = [0, 128], sizes = [8, 128], strides = [1, 1]} : vector<8x256xf32> to vector<8x128xf32>
    %cst_22 = arith.constant dense<0.000000e+00> : vector<8x128xf32>
    %106 = tpu.matmul %85, %7, %cst_22 {dimension_numbers = #tpu.dot_dimension_numbers<[1], [0], [0], [1], [0, 0, 1, 1], [], []>} : vector<8x32xf32>, vector<32x128xf32>, vector<8x128xf32> -> vector<8x128xf32>
    %107 = arith.addf %105, %106 : vector<8x128xf32>
    %108 = vector.broadcast %8 : vector<1x128xf32> to vector<8x128xf32>
    %109 = arith.addf %107, %108 : vector<8x128xf32>
    %110 = arith.negf %109 : vector<8x128xf32>
    %111 = math.exp %110 : vector<8x128xf32>
    %cst_23 = arith.constant 1.000000e+00 : f32
    %112 = vector.broadcast %cst_23 : f32 to vector<8x128xf32>
    %113 = arith.addf %112, %111 : vector<8x128xf32>
    %114 = arith.divf %112, %113 : vector<8x128xf32>
    %115 = vector.extract_strided_slice %114 {offsets = [0, 0], sizes = [8, 32], strides = [1, 1]} : vector<8x128xf32> to vector<8x32xf32>
    %116 = vector.extract_strided_slice %114 {offsets = [0, 32], sizes = [8, 32], strides = [1, 1]} : vector<8x128xf32> to vector<8x32xf32>
    %117 = vector.extract_strided_slice %114 {offsets = [0, 96], sizes = [8, 32], strides = [1, 1]} : vector<8x128xf32> to vector<8x32xf32>
    %118 = vector.extract_strided_slice %109 {offsets = [0, 64], sizes = [8, 32], strides = [1, 1]} : vector<8x128xf32> to vector<8x32xf32>
    %119 = math.tanh %118 : vector<8x32xf32>
    %120 = arith.mulf %116, %83 : vector<8x32xf32>
    %121 = arith.mulf %115, %119 : vector<8x32xf32>
    %122 = arith.addf %120, %121 : vector<8x32xf32>
    %123 = math.tanh %122 : vector<8x32xf32>
    %124 = arith.mulf %117, %123 : vector<8x32xf32>
    %125 = vector.extract_strided_slice %5 {offsets = [24, 0], sizes = [8, 128], strides = [1, 1]} : vector<64x128xf32> to vector<8x128xf32>
    %126 = vector.extract_strided_slice %104 {offsets = [0, 0], sizes = [8, 128], strides = [1, 1]} : vector<8x256xf32> to vector<8x128xf32>
    %127 = arith.addf %125, %126 : vector<8x128xf32>
    %128 = arith.negf %127 : vector<8x128xf32>
    %129 = math.exp %128 : vector<8x128xf32>
    %cst_24 = arith.constant 1.000000e+00 : f32
    %130 = vector.broadcast %cst_24 : f32 to vector<8x128xf32>
    %131 = arith.addf %130, %129 : vector<8x128xf32>
    %132 = arith.divf %130, %131 : vector<8x128xf32>
    %133 = vector.extract_strided_slice %132 {offsets = [0, 0], sizes = [8, 32], strides = [1, 1]} : vector<8x128xf32> to vector<8x32xf32>
    %134 = vector.extract_strided_slice %132 {offsets = [0, 32], sizes = [8, 32], strides = [1, 1]} : vector<8x128xf32> to vector<8x32xf32>
    %135 = vector.extract_strided_slice %132 {offsets = [0, 96], sizes = [8, 32], strides = [1, 1]} : vector<8x128xf32> to vector<8x32xf32>
    %136 = vector.extract_strided_slice %127 {offsets = [0, 64], sizes = [8, 32], strides = [1, 1]} : vector<8x128xf32> to vector<8x32xf32>
    %137 = math.tanh %136 : vector<8x32xf32>
    %138 = arith.mulf %134, %101 : vector<8x32xf32>
    %139 = arith.mulf %133, %137 : vector<8x32xf32>
    %140 = arith.addf %138, %139 : vector<8x32xf32>
    %141 = math.tanh %140 : vector<8x32xf32>
    %142 = arith.mulf %135, %141 : vector<8x32xf32>
    %cst_25 = arith.constant dense<0.000000e+00> : vector<8x256xf32>
    %143 = tpu.matmul %142, %6, %cst_25 {dimension_numbers = #tpu.dot_dimension_numbers<[1], [0], [0], [1], [0, 0, 1, 1], [], []>} : vector<8x32xf32>, vector<32x256xf32>, vector<8x256xf32> -> vector<8x256xf32>
    %144 = vector.extract_strided_slice %143 {offsets = [0, 128], sizes = [8, 128], strides = [1, 1]} : vector<8x256xf32> to vector<8x128xf32>
    %cst_26 = arith.constant dense<0.000000e+00> : vector<8x128xf32>
    %145 = tpu.matmul %124, %7, %cst_26 {dimension_numbers = #tpu.dot_dimension_numbers<[1], [0], [0], [1], [0, 0, 1, 1], [], []>} : vector<8x32xf32>, vector<32x128xf32>, vector<8x128xf32> -> vector<8x128xf32>
    %146 = arith.addf %144, %145 : vector<8x128xf32>
    %147 = vector.broadcast %8 : vector<1x128xf32> to vector<8x128xf32>
    %148 = arith.addf %146, %147 : vector<8x128xf32>
    %149 = arith.negf %148 : vector<8x128xf32>
    %150 = math.exp %149 : vector<8x128xf32>
    %cst_27 = arith.constant 1.000000e+00 : f32
    %151 = vector.broadcast %cst_27 : f32 to vector<8x128xf32>
    %152 = arith.addf %151, %150 : vector<8x128xf32>
    %153 = arith.divf %151, %152 : vector<8x128xf32>
    %154 = vector.extract_strided_slice %153 {offsets = [0, 0], sizes = [8, 32], strides = [1, 1]} : vector<8x128xf32> to vector<8x32xf32>
    %155 = vector.extract_strided_slice %153 {offsets = [0, 32], sizes = [8, 32], strides = [1, 1]} : vector<8x128xf32> to vector<8x32xf32>
    %156 = vector.extract_strided_slice %153 {offsets = [0, 96], sizes = [8, 32], strides = [1, 1]} : vector<8x128xf32> to vector<8x32xf32>
    %157 = vector.extract_strided_slice %148 {offsets = [0, 64], sizes = [8, 32], strides = [1, 1]} : vector<8x128xf32> to vector<8x32xf32>
    %158 = math.tanh %157 : vector<8x32xf32>
    %159 = arith.mulf %155, %122 : vector<8x32xf32>
    %160 = arith.mulf %154, %158 : vector<8x32xf32>
    %161 = arith.addf %159, %160 : vector<8x32xf32>
    %162 = math.tanh %161 : vector<8x32xf32>
    %163 = arith.mulf %156, %162 : vector<8x32xf32>
    %164 = vector.extract_strided_slice %5 {offsets = [32, 0], sizes = [8, 128], strides = [1, 1]} : vector<64x128xf32> to vector<8x128xf32>
    %165 = vector.extract_strided_slice %143 {offsets = [0, 0], sizes = [8, 128], strides = [1, 1]} : vector<8x256xf32> to vector<8x128xf32>
    %166 = arith.addf %164, %165 : vector<8x128xf32>
    %167 = arith.negf %166 : vector<8x128xf32>
    %168 = math.exp %167 : vector<8x128xf32>
    %cst_28 = arith.constant 1.000000e+00 : f32
    %169 = vector.broadcast %cst_28 : f32 to vector<8x128xf32>
    %170 = arith.addf %169, %168 : vector<8x128xf32>
    %171 = arith.divf %169, %170 : vector<8x128xf32>
    %172 = vector.extract_strided_slice %171 {offsets = [0, 0], sizes = [8, 32], strides = [1, 1]} : vector<8x128xf32> to vector<8x32xf32>
    %173 = vector.extract_strided_slice %171 {offsets = [0, 32], sizes = [8, 32], strides = [1, 1]} : vector<8x128xf32> to vector<8x32xf32>
    %174 = vector.extract_strided_slice %171 {offsets = [0, 96], sizes = [8, 32], strides = [1, 1]} : vector<8x128xf32> to vector<8x32xf32>
    %175 = vector.extract_strided_slice %166 {offsets = [0, 64], sizes = [8, 32], strides = [1, 1]} : vector<8x128xf32> to vector<8x32xf32>
    %176 = math.tanh %175 : vector<8x32xf32>
    %177 = arith.mulf %173, %140 : vector<8x32xf32>
    %178 = arith.mulf %172, %176 : vector<8x32xf32>
    %179 = arith.addf %177, %178 : vector<8x32xf32>
    %180 = math.tanh %179 : vector<8x32xf32>
    %181 = arith.mulf %174, %180 : vector<8x32xf32>
    %cst_29 = arith.constant dense<0.000000e+00> : vector<8x256xf32>
    %182 = tpu.matmul %181, %6, %cst_29 {dimension_numbers = #tpu.dot_dimension_numbers<[1], [0], [0], [1], [0, 0, 1, 1], [], []>} : vector<8x32xf32>, vector<32x256xf32>, vector<8x256xf32> -> vector<8x256xf32>
    %183 = vector.extract_strided_slice %182 {offsets = [0, 128], sizes = [8, 128], strides = [1, 1]} : vector<8x256xf32> to vector<8x128xf32>
    %cst_30 = arith.constant dense<0.000000e+00> : vector<8x128xf32>
    %184 = tpu.matmul %163, %7, %cst_30 {dimension_numbers = #tpu.dot_dimension_numbers<[1], [0], [0], [1], [0, 0, 1, 1], [], []>} : vector<8x32xf32>, vector<32x128xf32>, vector<8x128xf32> -> vector<8x128xf32>
    %185 = arith.addf %183, %184 : vector<8x128xf32>
    %186 = vector.broadcast %8 : vector<1x128xf32> to vector<8x128xf32>
    %187 = arith.addf %185, %186 : vector<8x128xf32>
    %188 = arith.negf %187 : vector<8x128xf32>
    %189 = math.exp %188 : vector<8x128xf32>
    %cst_31 = arith.constant 1.000000e+00 : f32
    %190 = vector.broadcast %cst_31 : f32 to vector<8x128xf32>
    %191 = arith.addf %190, %189 : vector<8x128xf32>
    %192 = arith.divf %190, %191 : vector<8x128xf32>
    %193 = vector.extract_strided_slice %192 {offsets = [0, 0], sizes = [8, 32], strides = [1, 1]} : vector<8x128xf32> to vector<8x32xf32>
    %194 = vector.extract_strided_slice %192 {offsets = [0, 32], sizes = [8, 32], strides = [1, 1]} : vector<8x128xf32> to vector<8x32xf32>
    %195 = vector.extract_strided_slice %192 {offsets = [0, 96], sizes = [8, 32], strides = [1, 1]} : vector<8x128xf32> to vector<8x32xf32>
    %196 = vector.extract_strided_slice %187 {offsets = [0, 64], sizes = [8, 32], strides = [1, 1]} : vector<8x128xf32> to vector<8x32xf32>
    %197 = math.tanh %196 : vector<8x32xf32>
    %198 = arith.mulf %194, %161 : vector<8x32xf32>
    %199 = arith.mulf %193, %197 : vector<8x32xf32>
    %200 = arith.addf %198, %199 : vector<8x32xf32>
    %201 = math.tanh %200 : vector<8x32xf32>
    %202 = arith.mulf %195, %201 : vector<8x32xf32>
    %203 = vector.extract_strided_slice %5 {offsets = [40, 0], sizes = [8, 128], strides = [1, 1]} : vector<64x128xf32> to vector<8x128xf32>
    %204 = vector.extract_strided_slice %182 {offsets = [0, 0], sizes = [8, 128], strides = [1, 1]} : vector<8x256xf32> to vector<8x128xf32>
    %205 = arith.addf %203, %204 : vector<8x128xf32>
    %206 = arith.negf %205 : vector<8x128xf32>
    %207 = math.exp %206 : vector<8x128xf32>
    %cst_32 = arith.constant 1.000000e+00 : f32
    %208 = vector.broadcast %cst_32 : f32 to vector<8x128xf32>
    %209 = arith.addf %208, %207 : vector<8x128xf32>
    %210 = arith.divf %208, %209 : vector<8x128xf32>
    %211 = vector.extract_strided_slice %210 {offsets = [0, 0], sizes = [8, 32], strides = [1, 1]} : vector<8x128xf32> to vector<8x32xf32>
    %212 = vector.extract_strided_slice %210 {offsets = [0, 32], sizes = [8, 32], strides = [1, 1]} : vector<8x128xf32> to vector<8x32xf32>
    %213 = vector.extract_strided_slice %210 {offsets = [0, 96], sizes = [8, 32], strides = [1, 1]} : vector<8x128xf32> to vector<8x32xf32>
    %214 = vector.extract_strided_slice %205 {offsets = [0, 64], sizes = [8, 32], strides = [1, 1]} : vector<8x128xf32> to vector<8x32xf32>
    %215 = math.tanh %214 : vector<8x32xf32>
    %216 = arith.mulf %212, %179 : vector<8x32xf32>
    %217 = arith.mulf %211, %215 : vector<8x32xf32>
    %218 = arith.addf %216, %217 : vector<8x32xf32>
    %219 = math.tanh %218 : vector<8x32xf32>
    %220 = arith.mulf %213, %219 : vector<8x32xf32>
    %cst_33 = arith.constant dense<0.000000e+00> : vector<8x256xf32>
    %221 = tpu.matmul %220, %6, %cst_33 {dimension_numbers = #tpu.dot_dimension_numbers<[1], [0], [0], [1], [0, 0, 1, 1], [], []>} : vector<8x32xf32>, vector<32x256xf32>, vector<8x256xf32> -> vector<8x256xf32>
    %222 = vector.extract_strided_slice %221 {offsets = [0, 128], sizes = [8, 128], strides = [1, 1]} : vector<8x256xf32> to vector<8x128xf32>
    %cst_34 = arith.constant dense<0.000000e+00> : vector<8x128xf32>
    %223 = tpu.matmul %202, %7, %cst_34 {dimension_numbers = #tpu.dot_dimension_numbers<[1], [0], [0], [1], [0, 0, 1, 1], [], []>} : vector<8x32xf32>, vector<32x128xf32>, vector<8x128xf32> -> vector<8x128xf32>
    %224 = arith.addf %222, %223 : vector<8x128xf32>
    %225 = vector.broadcast %8 : vector<1x128xf32> to vector<8x128xf32>
    %226 = arith.addf %224, %225 : vector<8x128xf32>
    %227 = arith.negf %226 : vector<8x128xf32>
    %228 = math.exp %227 : vector<8x128xf32>
    %cst_35 = arith.constant 1.000000e+00 : f32
    %229 = vector.broadcast %cst_35 : f32 to vector<8x128xf32>
    %230 = arith.addf %229, %228 : vector<8x128xf32>
    %231 = arith.divf %229, %230 : vector<8x128xf32>
    %232 = vector.extract_strided_slice %231 {offsets = [0, 0], sizes = [8, 32], strides = [1, 1]} : vector<8x128xf32> to vector<8x32xf32>
    %233 = vector.extract_strided_slice %231 {offsets = [0, 32], sizes = [8, 32], strides = [1, 1]} : vector<8x128xf32> to vector<8x32xf32>
    %234 = vector.extract_strided_slice %231 {offsets = [0, 96], sizes = [8, 32], strides = [1, 1]} : vector<8x128xf32> to vector<8x32xf32>
    %235 = vector.extract_strided_slice %226 {offsets = [0, 64], sizes = [8, 32], strides = [1, 1]} : vector<8x128xf32> to vector<8x32xf32>
    %236 = math.tanh %235 : vector<8x32xf32>
    %237 = arith.mulf %233, %200 : vector<8x32xf32>
    %238 = arith.mulf %232, %236 : vector<8x32xf32>
    %239 = arith.addf %237, %238 : vector<8x32xf32>
    %240 = math.tanh %239 : vector<8x32xf32>
    %241 = arith.mulf %234, %240 : vector<8x32xf32>
    %242 = vector.extract_strided_slice %5 {offsets = [48, 0], sizes = [8, 128], strides = [1, 1]} : vector<64x128xf32> to vector<8x128xf32>
    %243 = vector.extract_strided_slice %221 {offsets = [0, 0], sizes = [8, 128], strides = [1, 1]} : vector<8x256xf32> to vector<8x128xf32>
    %244 = arith.addf %242, %243 : vector<8x128xf32>
    %245 = arith.negf %244 : vector<8x128xf32>
    %246 = math.exp %245 : vector<8x128xf32>
    %cst_36 = arith.constant 1.000000e+00 : f32
    %247 = vector.broadcast %cst_36 : f32 to vector<8x128xf32>
    %248 = arith.addf %247, %246 : vector<8x128xf32>
    %249 = arith.divf %247, %248 : vector<8x128xf32>
    %250 = vector.extract_strided_slice %249 {offsets = [0, 0], sizes = [8, 32], strides = [1, 1]} : vector<8x128xf32> to vector<8x32xf32>
    %251 = vector.extract_strided_slice %249 {offsets = [0, 32], sizes = [8, 32], strides = [1, 1]} : vector<8x128xf32> to vector<8x32xf32>
    %252 = vector.extract_strided_slice %249 {offsets = [0, 96], sizes = [8, 32], strides = [1, 1]} : vector<8x128xf32> to vector<8x32xf32>
    %253 = vector.extract_strided_slice %244 {offsets = [0, 64], sizes = [8, 32], strides = [1, 1]} : vector<8x128xf32> to vector<8x32xf32>
    %254 = math.tanh %253 : vector<8x32xf32>
    %255 = arith.mulf %251, %218 : vector<8x32xf32>
    %256 = arith.mulf %250, %254 : vector<8x32xf32>
    %257 = arith.addf %255, %256 : vector<8x32xf32>
    %258 = math.tanh %257 : vector<8x32xf32>
    %259 = arith.mulf %252, %258 : vector<8x32xf32>
    %cst_37 = arith.constant dense<0.000000e+00> : vector<8x256xf32>
    %260 = tpu.matmul %259, %6, %cst_37 {dimension_numbers = #tpu.dot_dimension_numbers<[1], [0], [0], [1], [0, 0, 1, 1], [], []>} : vector<8x32xf32>, vector<32x256xf32>, vector<8x256xf32> -> vector<8x256xf32>
    %261 = vector.extract_strided_slice %260 {offsets = [0, 128], sizes = [8, 128], strides = [1, 1]} : vector<8x256xf32> to vector<8x128xf32>
    %cst_38 = arith.constant dense<0.000000e+00> : vector<8x128xf32>
    %262 = tpu.matmul %241, %7, %cst_38 {dimension_numbers = #tpu.dot_dimension_numbers<[1], [0], [0], [1], [0, 0, 1, 1], [], []>} : vector<8x32xf32>, vector<32x128xf32>, vector<8x128xf32> -> vector<8x128xf32>
    %263 = arith.addf %261, %262 : vector<8x128xf32>
    %264 = vector.broadcast %8 : vector<1x128xf32> to vector<8x128xf32>
    %265 = arith.addf %263, %264 : vector<8x128xf32>
    %266 = arith.negf %265 : vector<8x128xf32>
    %267 = math.exp %266 : vector<8x128xf32>
    %cst_39 = arith.constant 1.000000e+00 : f32
    %268 = vector.broadcast %cst_39 : f32 to vector<8x128xf32>
    %269 = arith.addf %268, %267 : vector<8x128xf32>
    %270 = arith.divf %268, %269 : vector<8x128xf32>
    %271 = vector.extract_strided_slice %270 {offsets = [0, 0], sizes = [8, 32], strides = [1, 1]} : vector<8x128xf32> to vector<8x32xf32>
    %272 = vector.extract_strided_slice %270 {offsets = [0, 32], sizes = [8, 32], strides = [1, 1]} : vector<8x128xf32> to vector<8x32xf32>
    %273 = vector.extract_strided_slice %270 {offsets = [0, 96], sizes = [8, 32], strides = [1, 1]} : vector<8x128xf32> to vector<8x32xf32>
    %274 = vector.extract_strided_slice %265 {offsets = [0, 64], sizes = [8, 32], strides = [1, 1]} : vector<8x128xf32> to vector<8x32xf32>
    %275 = math.tanh %274 : vector<8x32xf32>
    %276 = arith.mulf %272, %239 : vector<8x32xf32>
    %277 = arith.mulf %271, %275 : vector<8x32xf32>
    %278 = arith.addf %276, %277 : vector<8x32xf32>
    %279 = math.tanh %278 : vector<8x32xf32>
    %280 = arith.mulf %273, %279 : vector<8x32xf32>
    %281 = vector.extract_strided_slice %5 {offsets = [56, 0], sizes = [8, 128], strides = [1, 1]} : vector<64x128xf32> to vector<8x128xf32>
    %282 = vector.extract_strided_slice %260 {offsets = [0, 0], sizes = [8, 128], strides = [1, 1]} : vector<8x256xf32> to vector<8x128xf32>
    %283 = arith.addf %281, %282 : vector<8x128xf32>
    %284 = arith.negf %283 : vector<8x128xf32>
    %285 = math.exp %284 : vector<8x128xf32>
    %cst_40 = arith.constant 1.000000e+00 : f32
    %286 = vector.broadcast %cst_40 : f32 to vector<8x128xf32>
    %287 = arith.addf %286, %285 : vector<8x128xf32>
    %288 = arith.divf %286, %287 : vector<8x128xf32>
    %289 = vector.extract_strided_slice %288 {offsets = [0, 0], sizes = [8, 32], strides = [1, 1]} : vector<8x128xf32> to vector<8x32xf32>
    %290 = vector.extract_strided_slice %288 {offsets = [0, 32], sizes = [8, 32], strides = [1, 1]} : vector<8x128xf32> to vector<8x32xf32>
    %291 = vector.extract_strided_slice %288 {offsets = [0, 96], sizes = [8, 32], strides = [1, 1]} : vector<8x128xf32> to vector<8x32xf32>
    %292 = vector.extract_strided_slice %283 {offsets = [0, 64], sizes = [8, 32], strides = [1, 1]} : vector<8x128xf32> to vector<8x32xf32>
    %293 = math.tanh %292 : vector<8x32xf32>
    %294 = arith.mulf %290, %257 : vector<8x32xf32>
    %295 = arith.mulf %289, %293 : vector<8x32xf32>
    %296 = arith.addf %294, %295 : vector<8x32xf32>
    %297 = math.tanh %296 : vector<8x32xf32>
    %298 = arith.mulf %291, %297 : vector<8x32xf32>
    %cst_41 = arith.constant dense<0.000000e+00> : vector<8x256xf32>
    %299 = tpu.matmul %298, %6, %cst_41 {dimension_numbers = #tpu.dot_dimension_numbers<[1], [0], [0], [1], [0, 0, 1, 1], [], []>} : vector<8x32xf32>, vector<32x256xf32>, vector<8x256xf32> -> vector<8x256xf32>
    %300 = vector.extract_strided_slice %299 {offsets = [0, 128], sizes = [8, 128], strides = [1, 1]} : vector<8x256xf32> to vector<8x128xf32>
    %cst_42 = arith.constant dense<0.000000e+00> : vector<8x128xf32>
    %301 = tpu.matmul %280, %7, %cst_42 {dimension_numbers = #tpu.dot_dimension_numbers<[1], [0], [0], [1], [0, 0, 1, 1], [], []>} : vector<8x32xf32>, vector<32x128xf32>, vector<8x128xf32> -> vector<8x128xf32>
    %302 = arith.addf %300, %301 : vector<8x128xf32>
    %303 = vector.broadcast %8 : vector<1x128xf32> to vector<8x128xf32>
    %304 = arith.addf %302, %303 : vector<8x128xf32>
    %305 = arith.negf %304 : vector<8x128xf32>
    %306 = math.exp %305 : vector<8x128xf32>
    %cst_43 = arith.constant 1.000000e+00 : f32
    %307 = vector.broadcast %cst_43 : f32 to vector<8x128xf32>
    %308 = arith.addf %307, %306 : vector<8x128xf32>
    %309 = arith.divf %307, %308 : vector<8x128xf32>
    %310 = vector.extract_strided_slice %309 {offsets = [0, 0], sizes = [8, 32], strides = [1, 1]} : vector<8x128xf32> to vector<8x32xf32>
    %311 = vector.extract_strided_slice %309 {offsets = [0, 32], sizes = [8, 32], strides = [1, 1]} : vector<8x128xf32> to vector<8x32xf32>
    %312 = vector.extract_strided_slice %309 {offsets = [0, 96], sizes = [8, 32], strides = [1, 1]} : vector<8x128xf32> to vector<8x32xf32>
    %313 = vector.extract_strided_slice %304 {offsets = [0, 64], sizes = [8, 32], strides = [1, 1]} : vector<8x128xf32> to vector<8x32xf32>
    %314 = math.tanh %313 : vector<8x32xf32>
    %315 = arith.mulf %311, %278 : vector<8x32xf32>
    %316 = arith.mulf %310, %314 : vector<8x32xf32>
    %317 = arith.addf %315, %316 : vector<8x32xf32>
    %318 = math.tanh %317 : vector<8x32xf32>
    %319 = arith.mulf %312, %318 : vector<8x32xf32>
    %c0_44 = arith.constant 0 : index
    %c0_45 = arith.constant 0 : index
    %320 = vector.load %arg6[%c0_44, %c0_45] : memref<32x128xf32, #tpu.memory_space<vmem>>, vector<32x128xf32>
    %cst_46 = arith.constant dense<0.000000e+00> : vector<8x128xf32>
    %321 = tpu.matmul %319, %320, %cst_46 {dimension_numbers = #tpu.dot_dimension_numbers<[1], [0], [0], [1], [0, 0, 1, 1], [], []>} : vector<8x32xf32>, vector<32x128xf32>, vector<8x128xf32> -> vector<8x128xf32>
    %c0_47 = arith.constant 0 : index
    %c0_48 = arith.constant 0 : index
    %322 = vector.load %arg7[%c0_47, %c0_48] : memref<1x128xf32, #tpu.memory_space<vmem>>, vector<1x128xf32>
    %323 = vector.broadcast %322 : vector<1x128xf32> to vector<8x128xf32>
    %324 = arith.addf %321, %323 : vector<8x128xf32>
    %c0_49 = arith.constant 0 : index
    %c0_50 = arith.constant 0 : index
    %325 = vector.load %arg8[%c0_49, %c0_50] : memref<8x128xf32, #tpu.memory_space<vmem>>, vector<8x128xf32>
    tpu.vector_store %arg8[%c0_49, %c0_50], %324 {strides = array<i32>} : memref<8x128xf32, #tpu.memory_space<vmem>>, vector<8x128xf32>,
    return
  }
}

</mosaic_0001>

<llo_original>
// kernel: tpu_custom_call.1
$region0: #{tpu_custom_call.1}
  #allocation0 [shape = 'u32[]', space=smem, size = 0x4, offset = 0x4, fixed_abs, tag = 'smem constant byte address 0x4 - core index']
  #allocation1 [shape = 'u32[144,128]{1,0:T(1,128)}', space=vmem, size = 0x12000, scoped, tag = 'internal scratch']
  %s0 = inlined_call_operand.hbm [shape: f32[64,64], index: 0, kind: input, shape index: {}]
  %s1 = inlined_call_operand.hbm [shape: f32[64,128], index: 1, kind: input, shape index: {}]
  %s2 = inlined_call_operand.vmem [shape: f32[1,128], index: 2, kind: input, shape index: {}]
  %s3 = inlined_call_operand.hbm [shape: f32[32,256], index: 3, kind: input, shape index: {}]
  %s4 = inlined_call_operand.hbm [shape: f32[32,128], index: 4, kind: input, shape index: {}]
  %s5 = inlined_call_operand.vmem [shape: f32[1,128], index: 5, kind: input, shape index: {}]
  %s6 = inlined_call_operand.hbm [shape: f32[32,128], index: 6, kind: input, shape index: {}]
  %s7 = inlined_call_operand.vmem [shape: f32[1,128], index: 7, kind: input, shape index: {}]
  %s8 = inlined_call_operand.hbm [shape: f32[8,128], index: 8, kind: output, shape index: {}]
  %s9 = sld [smem:[#allocation0]]
  $region62: #{tpu_custom_call.1} parent=0
    _
  %s11 = ssub.s32 1, %s9
  %s12 = scalar_select 0, %s11, %s9
  $region1: #{tpu_custom_call.1} parent=0
    #allocation2 [shape = 'u8[32768]{0}', space=vmem, size = 0x8000, scoped, tag = 'input window, operand 0, single buffered']
    #allocation3 [shape = 's32[1]{0}', space=sflag, size = 0x4, scoped, tag = 'scoped memory for tpu_custom_call.1']
    #allocation4 [shape = 's32[1]{0}', space=sflag, size = 0x4, scoped, tag = 'scoped memory for tpu_custom_call.1']
    #allocation5 [shape = 'u8[32768]{0}', space=vmem, size = 0x8000, scoped, tag = 'input window, operand 1, single buffered']
    #allocation6 [shape = 's32[1]{0}', space=sflag, size = 0x4, scoped, tag = 'scoped memory for tpu_custom_call.1']
    #allocation7 [shape = 'u8[32768]{0}', space=vmem, size = 0x8000, scoped, tag = 'input window, operand 3, single buffered']
    #allocation8 [shape = 'u8[16384]{0}', space=vmem, size = 0x4000, scoped, tag = 'input window, operand 4, single buffered']
    #allocation9 [shape = 's32[1]{0}', space=sflag, size = 0x4, scoped, tag = 'scoped memory for tpu_custom_call.1']
    #allocation10 [shape = 'u8[16384]{0}', space=vmem, size = 0x4000, scoped, tag = 'input window, operand 6, single buffered']
    #allocation11 [shape = 'u8[4096]{0}', space=vmem, size = 0x1000, scoped, tag = 'output window, operand 0, single buffered']
    %13 = vsyncpa [#allocation3], 0
    %14 = vsyncpa [#allocation6], 0
    %15 = vsyncpa [#allocation9], 0
    %16 = vsyncpa [#allocation4], 0
    // Predicated region
    $region2: #{tpu_custom_call.1} parent=1 // pred_check
      _
    $region3: #{tpu_custom_call.1} parent=1 // pred_check_branch
      %18 = sbr.rel (0) target = $region5
    $region4: #{tpu_custom_call.1} parent=1 // pred_region
      %s20 = ssub.s32 1024, 1024
      %21 = vsyncadd [#allocation3], %s20
      %s22 = sshll.u32 [#allocation2], 4
      %s23 = int_to_ptr.vmem [resolvable:$true] %s22
      %28 = dma.hbm_to_vmem [thread:$0]  %s0, 1024, %s23, [#allocation3], 128, 128, 8
    $region5: #{tpu_custom_call.1} parent=1 // pred_fallthru
      _
    // Predicated region
    $region6: #{tpu_custom_call.1} parent=1 // pred_check
      _
    $region7: #{tpu_custom_call.1} parent=1 // pred_check_branch
      %30 = sbr.rel (0) target = $region9
    $region8: #{tpu_custom_call.1} parent=1 // pred_region
      %s32 = ssub.s32 1024, 1024
      %33 = vsyncadd [#allocation6], %s32
      %s34 = sshll.u32 [#allocation5], 4
      %s35 = int_to_ptr.vmem [resolvable:$true] %s34
      %40 = dma.hbm_to_vmem [thread:$0]  %s1, 1024, %s35, [#allocation6], 128, 128, 8
    $region9: #{tpu_custom_call.1} parent=1 // pred_fallthru
      _
    // Predicated region
    $region10: #{tpu_custom_call.1} parent=1 // pred_check
      _
    $region11: #{tpu_custom_call.1} parent=1 // pred_check_branch
      %42 = sbr.rel (0) target = $region13
    $region12: #{tpu_custom_call.1} parent=1 // pred_region
      _
    $region13: #{tpu_custom_call.1} parent=1 // pred_fallthru
      _
    // Predicated region
    $region14: #{tpu_custom_call.1} parent=1 // pred_check
      _
    $region15: #{tpu_custom_call.1} parent=1 // pred_check_branch
      %44 = sbr.rel (0) target = $region17
    $region16: #{tpu_custom_call.1} parent=1 // pred_region
      %s46 = ssub.s32 1024, 1024
      %47 = vsyncadd [#allocation6], %s46
      %s48 = sshll.u32 [#allocation7], 4
      %s49 = int_to_ptr.vmem [resolvable:$true] %s48
      %54 = dma.hbm_to_vmem [thread:$0]  %s3, 1024, %s49, [#allocation6], 256, 256, 16
    $region17: #{tpu_custom_call.1} parent=1 // pred_fallthru
      _
    // Predicated region
    $region18: #{tpu_custom_call.1} parent=1 // pred_check
      _
    $region19: #{tpu_custom_call.1} parent=1 // pred_check_branch
      %56 = sbr.rel (0) target = $region21
    $region20: #{tpu_custom_call.1} parent=1 // pred_region
      %s58 = ssub.s32 512, 512
      %59 = vsyncadd [#allocation9], %s58
      %s60 = sshll.u32 [#allocation8], 4
      %s61 = int_to_ptr.vmem [resolvable:$true] %s60
      %66 = dma.hbm_to_vmem [thread:$0]  %s4, 512, %s61, [#allocation9], 128, 128, 8
    $region21: #{tpu_custom_call.1} parent=1 // pred_fallthru
      _
    // Predicated region
    $region22: #{tpu_custom_call.1} parent=1 // pred_check
      _
    $region23: #{tpu_custom_call.1} parent=1 // pred_check_branch
      %68 = sbr.rel (0) target = $region25
    $region24: #{tpu_custom_call.1} parent=1 // pred_region
      _
    $region25: #{tpu_custom_call.1} parent=1 // pred_fallthru
      _
    // Predicated region
    $region26: #{tpu_custom_call.1} parent=1 // pred_check
      _
    $region27: #{tpu_custom_call.1} parent=1 // pred_check_branch
      %70 = sbr.rel (0) target = $region29
    $region28: #{tpu_custom_call.1} parent=1 // pred_region
      %s72 = ssub.s32 512, 512
      %73 = vsyncadd [#allocation9], %s72
      %s74 = sshll.u32 [#allocation10], 4
      %s75 = int_to_ptr.vmem [resolvable:$true] %s74
      %80 = dma.hbm_to_vmem [thread:$0]  %s6, 512, %s75, [#allocation9], 128, 128, 8
    $region29: #{tpu_custom_call.1} parent=1 // pred_fallthru
      _
    // Predicated region
    $region30: #{tpu_custom_call.1} parent=1 // pred_check
      _
    $region31: #{tpu_custom_call.1} parent=1 // pred_check_branch
      %82 = sbr.rel (0) target = $region33
    $region32: #{tpu_custom_call.1} parent=1 // pred_region
      _
    $region33: #{tpu_custom_call.1} parent=1 // pred_fallthru
      _
    // Predicated region
    $region34: #{tpu_custom_call.1} parent=1 // pred_check
      _
    $region35: #{tpu_custom_call.1} parent=1 // pred_check_branch
      %84 = sbr.rel (0) target = $region37
    $region36: #{tpu_custom_call.1} parent=1 // pred_region
      %85 = dma.done [#allocation3], 1024
    $region37: #{tpu_custom_call.1} parent=1 // pred_fallthru
      _
    // Predicated region
    $region38: #{tpu_custom_call.1} parent=1 // pred_check
      _
    $region39: #{tpu_custom_call.1} parent=1 // pred_check_branch
      %87 = sbr.rel (0) target = $region41
    $region40: #{tpu_custom_call.1} parent=1 // pred_region
      %88 = dma.done [#allocation6], 1024
    $region41: #{tpu_custom_call.1} parent=1 // pred_fallthru
      _
    // Predicated region
    $region42: #{tpu_custom_call.1} parent=1 // pred_check
      _
    $region43: #{tpu_custom_call.1} parent=1 // pred_check_branch
      %90 = sbr.rel (0) target = $region45
    $region44: #{tpu_custom_call.1} parent=1 // pred_region
      %91 = dma.done [#allocation6], 1024
    $region45: #{tpu_custom_call.1} parent=1 // pred_fallthru
      _
    // Predicated region
    $region46: #{tpu_custom_call.1} parent=1 // pred_check
      _
    $region47: #{tpu_custom_call.1} parent=1 // pred_check_branch
      %93 = sbr.rel (0) target = $region49
    $region48: #{tpu_custom_call.1} parent=1 // pred_region
      %94 = dma.done [#allocation9], 512
    $region49: #{tpu_custom_call.1} parent=1 // pred_fallthru
      _
    // Predicated region
    $region50: #{tpu_custom_call.1} parent=1 // pred_check
      _
    $region51: #{tpu_custom_call.1} parent=1 // pred_check_branch
      %96 = sbr.rel (0) target = $region53
    $region52: #{tpu_custom_call.1} parent=1 // pred_region
      %97 = dma.done [#allocation9], 512
    $region53: #{tpu_custom_call.1} parent=1 // pred_fallthru
      _
    %v98 = vld [vmem:[#allocation2] sm:$0xff]
    %v99 = vld [vmem:[#allocation2 + $0x8] sm:$0xff]
    %v100 = vld [vmem:[#allocation2 + $0x10] sm:$0xff]
    %v101 = vld [vmem:[#allocation2 + $0x18] sm:$0xff]
    %v102 = vld [vmem:[#allocation2 + $0x20] sm:$0xff]
    %v103 = vld [vmem:[#allocation2 + $0x28] sm:$0xff]
    %v104 = vld [vmem:[#allocation2 + $0x30] sm:$0xff]
    %v105 = vld [vmem:[#allocation2 + $0x38] sm:$0xff]
    %v106 = vld [vmem:[#allocation5] sm:$0xff]
    %v107 = vld [vmem:[#allocation5 + $0x8] sm:$0xff]
    %v108 = vld [vmem:[#allocation5 + $0x10] sm:$0xff]
    %v109 = vld [vmem:[#allocation5 + $0x18] sm:$0xff]
    %v110 = vld [vmem:[#allocation5 + $0x20] sm:$0xff]
    %v111 = vld [vmem:[#allocation5 + $0x28] sm:$0xff]
    %v112 = vld [vmem:[#allocation5 + $0x30] sm:$0xff]
    %v113 = vld [vmem:[#allocation5 + $0x38] sm:$0xff]
    %v114 = vld [vmem:[%s2] sm:$0x1]
    %v116 = vlaneseq
    %v117 = vshrl.u32 %v116, 7
    %v118 = vsub.s32 0, %v117
    %v119 = vrot.slane %v114, %v118
    %vm121 = vcmask 523264
    %v123 = vsel %vm121, %v98, 0
    %v126 = vsel %vm121, %v99, 0
    %v129 = vsel %vm121, %v100, 0
    %v132 = vsel %vm121, %v101, 0
    %v135 = vsel %vm121, %v102, 0
    %v138 = vsel %vm121, %v103, 0
    %v141 = vsel %vm121, %v104, 0
    %v144 = vsel %vm121, %v105, 0
    %146 = vmatprep.subr.mxu0 0.0
    %147 = vmatpush1.msra.mxu0 %v106
    %148 = vmatprep.subr.mxu0 0.0
    %149 = vmatpush1.msra.mxu0 %v107
    %150 = vmatprep.subr.mxu0 0.0
    %151 = vmatpush1.msra.mxu0 %v108
    %152 = vmatprep.subr.mxu0 0.0
    %153 = vmatpush1.msra.mxu0 %v109
    %154 = vmatprep.subr.mxu0 0.0
    %155 = vmatpush1.msra.mxu0 %v110
    %156 = vmatprep.subr.mxu0 0.0
    %157 = vmatpush1.msra.mxu0 %v111
    %158 = vmatprep.subr.mxu0 0.0
    %159 = vmatpush1.msra.mxu0 %v112
    %160 = vmatprep.subr.mxu0 0.0
    %161 = vmatpush1.msra.mxu0 %v113
    %162 = vmatprep.subr.mxu0 0.0
    %163 = vmatpush1.msra.mxu0 0.0
    %164 = vmatprep.subr.mxu0 0.0
    %165 = vmatpush1.msra.mxu0 0.0
    %166 = vmatprep.subr.mxu0 0.0
    %167 = vmatpush1.msra.mxu0 0.0
    %168 = vmatprep.subr.mxu0 0.0
    %169 = vmatpush1.msra.mxu0 0.0
    %170 = vmatprep.subr.mxu0 0.0
    %171 = vmatpush1.msra.mxu0 0.0
    %172 = vmatprep.subr.mxu0 0.0
    %173 = vmatpush1.msra.mxu0 0.0
    %174 = vmatprep.subr.mxu0 0.0
    %175 = vmatpush1.msra.mxu0 0.0
    %176 = vmatprep.subr.mxu0 0.0
    %177 = vmatpush1.msra.mxu0 0.0
    %178 = vmatprep.subr.mxu0 0.0
    %179 = vmatpush1.msra.mxu0 0.0
    %180 = vmatprep.subr.mxu0 0.0
    %181 = vmatpush1.msra.mxu0 0.0
    %182 = vmatprep.subr.mxu0 0.0
    %183 = vmatpush1.msra.mxu0 0.0
    %184 = vmatprep.subr.mxu0 0.0
    %185 = vmatpush1.msra.mxu0 0.0
    %186 = vmatprep.subr.mxu0 0.0
    %187 = vmatpush1.msra.mxu0 0.0
    %188 = vmatprep.subr.mxu0 0.0
    %189 = vmatpush1.msra.mxu0 0.0
    %190 = vmatprep.subr.mxu0 0.0
    %191 = vmatpush1.msra.mxu0 0.0
    %192 = vmatprep.subr.mxu0 0.0
    %193 = vmatpush1.msra.mxu0 0.0
    %194 = vmatprep.subr.mxu0 0.0
    %195 = vmatpush1.msra.mxu0 0.0
    %196 = vmatprep.subr.mxu0 0.0
    %197 = vmatpush1.msra.mxu0 0.0
    %198 = vmatprep.subr.mxu0 0.0
    %199 = vmatpush1.msra.mxu0 0.0
    %200 = vmatprep.subr.mxu0 0.0
    %201 = vmatpush1.msra.mxu0 0.0
    %202 = vmatprep.subr.mxu0 0.0
    %203 = vmatpush1.msra.mxu0 0.0
    %204 = vmatprep.subr.mxu0 0.0
    %205 = vmatpush1.msra.mxu0 0.0
    %206 = vmatprep.subr.mxu0 0.0
    %207 = vmatpush1.msra.mxu0 0.0
    %208 = vmatprep.subr.mxu0 0.0
    %209 = vmatpush1.msra.mxu0 0.0
    %210 = vmatprep.mubr.f32.mxu0 0.0
    %211 = vmatmul.mubr.f32.gmra.mrb[0].mxu0 %v123
    %v212 = vpop.f32.mrb[0].mxu0
    %v213 = vadd.f32 %v119, %v212
    %v214 = vpop.f32.mrb[0].mxu0
    %215 = vmatprep.mubr.f32.mxu0 0.0
    %216 = vmatmul.mubr.f32.gmra.mrb[0].mxu0 %v126
    %v217 = vpop.f32.mrb[0].mxu0
    %v218 = vadd.f32 %v119, %v217
    %v219 = vpop.f32.mrb[0].mxu0
    %220 = vmatprep.mubr.f32.mxu0 0.0
    %221 = vmatmul.mubr.f32.gmra.mrb[0].mxu0 %v129
    %v222 = vpop.f32.mrb[0].mxu0
    %v223 = vadd.f32 %v119, %v222
    %v224 = vpop.f32.mrb[0].mxu0
    %225 = vmatprep.mubr.f32.mxu0 0.0
    %226 = vmatmul.mubr.f32.gmra.mrb[0].mxu0 %v132
    %v227 = vpop.f32.mrb[0].mxu0
    %v228 = vadd.f32 %v119, %v227
    %v229 = vpop.f32.mrb[0].mxu0
    %230 = vmatprep.mubr.f32.mxu0 0.0
    %231 = vmatmul.mubr.f32.gmra.mrb[0].mxu0 %v135
    %v232 = vpop.f32.mrb[0].mxu0
    %v233 = vadd.f32 %v119, %v232
    %v234 = vpop.f32.mrb[0].mxu0
    %235 = vmatprep.mubr.f32.mxu0 0.0
    %236 = vmatmul.mubr.f32.gmra.mrb[0].mxu0 %v138
    %v237 = vpop.f32.mrb[0].mxu0
    %v238 = vadd.f32 %v119, %v237
    %v239 = vpop.f32.mrb[0].mxu0
    %240 = vmatprep.mubr.f32.mxu0 0.0
    %241 = vmatmul.mubr.f32.gmra.mrb[0].mxu0 %v141
    %v242 = vpop.f32.mrb[0].mxu0
    %v243 = vadd.f32 %v119, %v242
    %v244 = vpop.f32.mrb[0].mxu0
    %245 = vmatprep.mubr.f32.mxu0 0.0
    %246 = vmatmul.mubr.f32.gmra.mrb[0].mxu0 %v144
    %v247 = vpop.f32.mrb[0].mxu0
    %v248 = vadd.f32 %v119, %v247
    %v249 = vpop.f32.mrb[0].mxu0
    %250 = vdwg.mxu0
    %v251 = vld [vmem:[#allocation7] sm:$0xff]
    %v252 = vld [vmem:[#allocation7 + $0x8] sm:$0xff]
    %v253 = vld [vmem:[#allocation7 + $0x10] sm:$0xff]
    %v254 = vld [vmem:[#allocation7 + $0x18] sm:$0xff]
    %v255 = vld [vmem:[#allocation7 + $0x20] sm:$0xff]
    %v256 = vld [vmem:[#allocation7 + $0x28] sm:$0xff]
    %v257 = vld [vmem:[#allocation7 + $0x30] sm:$0xff]
    %v258 = vld [vmem:[#allocation7 + $0x38] sm:$0xff]
    %v259 = vld [vmem:[#allocation8] sm:$0xff]
    %v260 = vld [vmem:[#allocation8 + $0x8] sm:$0xff]
    %v261 = vld [vmem:[#allocation8 + $0x10] sm:$0xff]
    %v262 = vld [vmem:[#allocation8 + $0x18] sm:$0xff]
    %v263 = vld [vmem:[%s5] sm:$0x1]
    %v264 = vxor.u32 %v213, 2147483648
    %v265 = vmul.f32 %v264, 1.442695
    %v266 = vpow.pop %v265
    %v267 = vadd.f32 %v266, 1.0
    %v268 = vrcp.pop %v267
    %v269 = vmul.f32 1.0, %v268
    %v270 = vtanh.pop %v213
    %v271 = vmul.f32 %v269, 0.0
    %273 = vrot.lane.b32.xlu0 %v270, 64
    %v274 = vpop.permute.xlu0 %273
    %v276 = vmul.f32 %v269, %v274
    %278 = vrot.lane.b32.xlu0 %v276, 32
    %v279 = vpop.permute.xlu0 %278
    %v281 = vadd.f32 %v271, %v279
    %v282 = vtanh.pop %v281
    %284 = vrot.lane.b32.xlu0 %v282, 64
    %v285 = vpop.permute.xlu0 %284
    %v287 = vmul.f32 %v269, %v285
    %289 = vrot.lane.b32.xlu0 %v287, 32
    %v290 = vpop.permute.xlu0 %289
    %vm291 = vcmask 261120
    %v292 = vsel %vm291, %v290, 0
    %294 = vmatprep.subr.mxu0 %v252
    %295 = vmatpush1.msra.mxu0 %v251
    %296 = vmatprep.subr.mxu0 %v254
    %297 = vmatpush1.msra.mxu0 %v253
    %298 = vmatprep.subr.mxu0 %v256
    %299 = vmatpush1.msra.mxu0 %v255
    %300 = vmatprep.subr.mxu0 %v258
    %301 = vmatpush1.msra.mxu0 %v257
    %302 = vmatprep.subr.mxu0 0.0
    %303 = vmatpush1.msra.mxu0 0.0
    %304 = vmatprep.subr.mxu0 0.0
    %305 = vmatpush1.msra.mxu0 0.0
    %306 = vmatprep.subr.mxu0 0.0
    %307 = vmatpush1.msra.mxu0 0.0
    %308 = vmatprep.subr.mxu0 0.0
    %309 = vmatpush1.msra.mxu0 0.0
    %310 = vmatprep.subr.mxu0 0.0
    %311 = vmatpush1.msra.mxu0 0.0
    %312 = vmatprep.subr.mxu0 0.0
    %313 = vmatpush1.msra.mxu0 0.0
    %314 = vmatprep.subr.mxu0 0.0
    %315 = vmatpush1.msra.mxu0 0.0
    %316 = vmatprep.subr.mxu0 0.0
    %317 = vmatpush1.msra.mxu0 0.0
    %318 = vmatprep.subr.mxu0 0.0
    %319 = vmatpush1.msra.mxu0 0.0
    %320 = vmatprep.subr.mxu0 0.0
    %321 = vmatpush1.msra.mxu0 0.0
    %322 = vmatprep.subr.mxu0 0.0
    %323 = vmatpush1.msra.mxu0 0.0
    %324 = vmatprep.subr.mxu0 0.0
    %325 = vmatpush1.msra.mxu0 0.0
    %326 = vmatprep.subr.mxu0 0.0
    %327 = vmatpush1.msra.mxu0 0.0
    %328 = vmatprep.subr.mxu0 0.0
    %329 = vmatpush1.msra.mxu0 0.0
    %330 = vmatprep.subr.mxu0 0.0
    %331 = vmatpush1.msra.mxu0 0.0
    %332 = vmatprep.subr.mxu0 0.0
    %333 = vmatpush1.msra.mxu0 0.0
    %334 = vmatprep.subr.mxu0 0.0
    %335 = vmatpush1.msra.mxu0 0.0
    %336 = vmatprep.subr.mxu0 0.0
    %337 = vmatpush1.msra.mxu0 0.0
    %338 = vmatprep.subr.mxu0 0.0
    %339 = vmatpush1.msra.mxu0 0.0
    %340 = vmatprep.subr.mxu0 0.0
    %341 = vmatpush1.msra.mxu0 0.0
    %342 = vmatprep.subr.mxu0 0.0
    %343 = vmatpush1.msra.mxu0 0.0
    %344 = vmatprep.subr.mxu0 0.0
    %345 = vmatpush1.msra.mxu0 0.0
    %346 = vmatprep.subr.mxu0 0.0
    %347 = vmatpush1.msra.mxu0 0.0
    %348 = vmatprep.subr.mxu0 0.0
    %349 = vmatpush1.msra.mxu0 0.0
    %350 = vmatprep.subr.mxu0 0.0
    %351 = vmatpush1.msra.mxu0 0.0
    %352 = vmatprep.subr.mxu0 0.0
    %353 = vmatpush1.msra.mxu0 0.0
    %354 = vmatprep.subr.mxu0 0.0
    %355 = vmatpush1.msra.mxu0 0.0
    %356 = vmatprep.subr.mxu0 0.0
    %357 = vmatpush1.msra.mxu0 0.0
    %358 = vmatprep.mubr.f32.mxu0 0.0
    %359 = vmatmul.mubr.f32.gmra.mrb[0].mxu0 %v292
    %v360 = vpop.f32.mrb[0].mxu0
    %v361 = vadd.f32 0.0, %v360
    %v362 = vpop.f32.mrb[0].mxu0
    %v363 = vadd.f32 0.0, %v362
    %364 = vdwg.mxu0
    %v366 = vsel %vm291, 0.0, 0
    %368 = vmatprep.subr.mxu0 0.0
    %369 = vmatpush1.msra.mxu0 %v259
    %370 = vmatprep.subr.mxu0 0.0
    %371 = vmatpush1.msra.mxu0 %v260
    %372 = vmatprep.subr.mxu0 0.0
    %373 = vmatpush1.msra.mxu0 %v261
    %374 = vmatprep.subr.mxu0 0.0
    %375 = vmatpush1.msra.mxu0 %v262
    %376 = vmatprep.subr.mxu0 0.0
    %377 = vmatpush1.msra.mxu0 0.0
    %378 = vmatprep.subr.mxu0 0.0
    %379 = vmatpush1.msra.mxu0 0.0
    %380 = vmatprep.subr.mxu0 0.0
    %381 = vmatpush1.msra.mxu0 0.0
    %382 = vmatprep.subr.mxu0 0.0
    %383 = vmatpush1.msra.mxu0 0.0
    %384 = vmatprep.subr.mxu0 0.0
    %385 = vmatpush1.msra.mxu0 0.0
    %386 = vmatprep.subr.mxu0 0.0
    %387 = vmatpush1.msra.mxu0 0.0
    %388 = vmatprep.subr.mxu0 0.0
    %389 = vmatpush1.msra.mxu0 0.0
    %390 = vmatprep.subr.mxu0 0.0
    %391 = vmatpush1.msra.mxu0 0.0
    %392 = vmatprep.subr.mxu0 0.0
    %393 = vmatpush1.msra.mxu0 0.0
    %394 = vmatprep.subr.mxu0 0.0
    %395 = vmatpush1.msra.mxu0 0.0
    %396 = vmatprep.subr.mxu0 0.0
    %397 = vmatpush1.msra.mxu0 0.0
    %398 = vmatprep.subr.mxu0 0.0
    %399 = vmatpush1.msra.mxu0 0.0
    %400 = vmatprep.subr.mxu0 0.0
    %401 = vmatpush1.msra.mxu0 0.0
    %402 = vmatprep.subr.mxu0 0.0
    %403 = vmatpush1.msra.mxu0 0.0
    %404 = vmatprep.subr.mxu0 0.0
    %405 = vmatpush1.msra.mxu0 0.0
    %406 = vmatprep.subr.mxu0 0.0
    %407 = vmatpush1.msra.mxu0 0.0
    %408 = vmatprep.subr.mxu0 0.0
    %409 = vmatpush1.msra.mxu0 0.0
    %410 = vmatprep.subr.mxu0 0.0
    %411 = vmatpush1.msra.mxu0 0.0
    %412 = vmatprep.subr.mxu0 0.0
    %413 = vmatpush1.msra.mxu0 0.0
    %414 = vmatprep.subr.mxu0 0.0
    %415 = vmatpush1.msra.mxu0 0.0
    %416 = vmatprep.subr.mxu0 0.0
    %417 = vmatpush1.msra.mxu0 0.0
    %418 = vmatprep.subr.mxu0 0.0
    %419 = vmatpush1.msra.mxu0 0.0
    %420 = vmatprep.subr.mxu0 0.0
    %421 = vmatpush1.msra.mxu0 0.0
    %422 = vmatprep.subr.mxu0 0.0
    %423 = vmatpush1.msra.mxu0 0.0
    %424 = vmatprep.subr.mxu0 0.0
    %425 = vmatpush1.msra.mxu0 0.0
    %426 = vmatprep.subr.mxu0 0.0
    %427 = vmatpush1.msra.mxu0 0.0
    %428 = vmatprep.subr.mxu0 0.0
    %429 = vmatpush1.msra.mxu0 0.0
    %430 = vmatprep.subr.mxu0 0.0
    %431 = vmatpush1.msra.mxu0 0.0
    %432 = vmatprep.mubr.f32.mxu0 0.0
    %433 = vmatmul.mubr.f32.gmra.mrb[0].mxu0 %v366
    %v434 = vpop.f32.mrb[0].mxu0
    %v435 = vadd.f32 0.0, %v434
    %v436 = vpop.f32.mrb[0].mxu0
    %437 = vdwg.mxu0
    %v438 = vadd.f32 %v363, %v435
    %v440 = vlaneseq
    %v441 = vshrl.u32 %v440, 7
    %v442 = vsub.s32 0, %v441
    %v443 = vrot.slane %v263, %v442
    %v445 = vadd.f32 %v438, %v443
    %v446 = vxor.u32 %v445, 2147483648
    %v447 = vmul.f32 %v446, 1.442695
    %v448 = vpow.pop %v447
    %v449 = vadd.f32 %v448, 1.0
    %v450 = vrcp.pop %v449
    %v451 = vmul.f32 1.0, %v450
    %v452 = vtanh.pop %v445
    %v453 = vmul.f32 %v451, 0.0
    %455 = vrot.lane.b32.xlu0 %v452, 64
    %v456 = vpop.permute.xlu0 %455
    %v458 = vmul.f32 %v451, %v456
    %460 = vrot.lane.b32.xlu0 %v458, 32
    %v461 = vpop.permute.xlu0 %460
    %v463 = vadd.f32 %v453, %v461
    %v464 = vtanh.pop %v463
    %466 = vrot.lane.b32.xlu0 %v464, 64
    %v467 = vpop.permute.xlu0 %466
    %v469 = vmul.f32 %v451, %v467
    %v470 = vadd.f32 %v218, %v361
    %v471 = vxor.u32 %v470, 2147483648
    %v472 = vmul.f32 %v471, 1.442695
    %v473 = vpow.pop %v472
    %v474 = vadd.f32 %v473, 1.0
    %v475 = vrcp.pop %v474
    %v476 = vmul.f32 1.0, %v475
    %v477 = vtanh.pop %v470
    %v478 = vmul.f32 %v476, %v281
    %480 = vrot.lane.b32.xlu0 %v477, 64
    %v481 = vpop.permute.xlu0 %480
    %v483 = vmul.f32 %v476, %v481
    %485 = vrot.lane.b32.xlu0 %v483, 32
    %v486 = vpop.permute.xlu0 %485
    %v488 = vadd.f32 %v478, %v486
    %v489 = vtanh.pop %v488
    %491 = vrot.lane.b32.xlu0 %v489, 64
    %v492 = vpop.permute.xlu0 %491
    %v494 = vmul.f32 %v476, %v492
    %496 = vrot.lane.b32.xlu0 %v494, 32
    %v497 = vpop.permute.xlu0 %496
    %v498 = vsel %vm291, %v497, 0
    %500 = vmatprep.subr.mxu0 %v252
    %501 = vmatpush1.msra.mxu0 %v251
    %502 = vmatprep.subr.mxu0 %v254
    %503 = vmatpush1.msra.mxu0 %v253
    %504 = vmatprep.subr.mxu0 %v256
    %505 = vmatpush1.msra.mxu0 %v255
    %506 = vmatprep.subr.mxu0 %v258
    %507 = vmatpush1.msra.mxu0 %v257
    %508 = vmatprep.subr.mxu0 0.0
    %509 = vmatpush1.msra.mxu0 0.0
    %510 = vmatprep.subr.mxu0 0.0
    %511 = vmatpush1.msra.mxu0 0.0
    %512 = vmatprep.subr.mxu0 0.0
    %513 = vmatpush1.msra.mxu0 0.0
    %514 = vmatprep.subr.mxu0 0.0
    %515 = vmatpush1.msra.mxu0 0.0
    %516 = vmatprep.subr.mxu0 0.0
    %517 = vmatpush1.msra.mxu0 0.0
    %518 = vmatprep.subr.mxu0 0.0
    %519 = vmatpush1.msra.mxu0 0.0
    %520 = vmatprep.subr.mxu0 0.0
    %521 = vmatpush1.msra.mxu0 0.0
    %522 = vmatprep.subr.mxu0 0.0
    %523 = vmatpush1.msra.mxu0 0.0
    %524 = vmatprep.subr.mxu0 0.0
    %525 = vmatpush1.msra.mxu0 0.0
    %526 = vmatprep.subr.mxu0 0.0
    %527 = vmatpush1.msra.mxu0 0.0
    %528 = vmatprep.subr.mxu0 0.0
    %529 = vmatpush1.msra.mxu0 0.0
    %530 = vmatprep.subr.mxu0 0.0
    %531 = vmatpush1.msra.mxu0 0.0
    %532 = vmatprep.subr.mxu0 0.0
    %533 = vmatpush1.msra.mxu0 0.0
    %534 = vmatprep.subr.mxu0 0.0
    %535 = vmatpush1.msra.mxu0 0.0
    %536 = vmatprep.subr.mxu0 0.0
    %537 = vmatpush1.msra.mxu0 0.0
    %538 = vmatprep.subr.mxu0 0.0
    %539 = vmatpush1.msra.mxu0 0.0
    %540 = vmatprep.subr.mxu0 0.0
    %541 = vmatpush1.msra.mxu0 0.0
    %542 = vmatprep.subr.mxu0 0.0
    %543 = vmatpush1.msra.mxu0 0.0
    %544 = vmatprep.subr.mxu0 0.0
    %545 = vmatpush1.msra.mxu0 0.0
    %546 = vmatprep.subr.mxu0 0.0
    %547 = vmatpush1.msra.mxu0 0.0
    %548 = vmatprep.subr.mxu0 0.0
    %549 = vmatpush1.msra.mxu0 0.0
    %550 = vmatprep.subr.mxu0 0.0
    %551 = vmatpush1.msra.mxu0 0.0
    %552 = vmatprep.subr.mxu0 0.0
    %553 = vmatpush1.msra.mxu0 0.0
    %554 = vmatprep.subr.mxu0 0.0
    %555 = vmatpush1.msra.mxu0 0.0
    %556 = vmatprep.subr.mxu0 0.0
    %557 = vmatpush1.msra.mxu0 0.0
    %558 = vmatprep.subr.mxu0 0.0
    %559 = vmatpush1.msra.mxu0 0.0
    %560 = vmatprep.subr.mxu0 0.0
    %561 = vmatpush1.msra.mxu0 0.0
    %562 = vmatprep.subr.mxu0 0.0
    %563 = vmatpush1.msra.mxu0 0.0
    %564 = vmatprep.mubr.f32.mxu0 0.0
    %565 = vmatmul.mubr.f32.gmra.mrb[0].mxu0 %v498
    %v566 = vpop.f32.mrb[0].mxu0
    %v567 = vadd.f32 0.0, %v566
    %v568 = vpop.f32.mrb[0].mxu0
    %v569 = vadd.f32 0.0, %v568
    %570 = vdwg.mxu0
    %572 = vrot.lane.b32.xlu0 %v469, 32
    %v573 = vpop.permute.xlu0 %572
    %v574 = vsel %vm291, %v573, 0
    %576 = vmatprep.subr.mxu0 0.0
    %577 = vmatpush1.msra.mxu0 %v259
    %578 = vmatprep.subr.mxu0 0.0
    %579 = vmatpush1.msra.mxu0 %v260
    %580 = vmatprep.subr.mxu0 0.0
    %581 = vmatpush1.msra.mxu0 %v261
    %582 = vmatprep.subr.mxu0 0.0
    %583 = vmatpush1.msra.mxu0 %v262
    %584 = vmatprep.subr.mxu0 0.0
    %585 = vmatpush1.msra.mxu0 0.0
    %586 = vmatprep.subr.mxu0 0.0
    %587 = vmatpush1.msra.mxu0 0.0
    %588 = vmatprep.subr.mxu0 0.0
    %589 = vmatpush1.msra.mxu0 0.0
    %590 = vmatprep.subr.mxu0 0.0
    %591 = vmatpush1.msra.mxu0 0.0
    %592 = vmatprep.subr.mxu0 0.0
    %593 = vmatpush1.msra.mxu0 0.0
    %594 = vmatprep.subr.mxu0 0.0
    %595 = vmatpush1.msra.mxu0 0.0
    %596 = vmatprep.subr.mxu0 0.0
    %597 = vmatpush1.msra.mxu0 0.0
    %598 = vmatprep.subr.mxu0 0.0
    %599 = vmatpush1.msra.mxu0 0.0
    %600 = vmatprep.subr.mxu0 0.0
    %601 = vmatpush1.msra.mxu0 0.0
    %602 = vmatprep.subr.mxu0 0.0
    %603 = vmatpush1.msra.mxu0 0.0
    %604 = vmatprep.subr.mxu0 0.0
    %605 = vmatpush1.msra.mxu0 0.0
    %606 = vmatprep.subr.mxu0 0.0
    %607 = vmatpush1.msra.mxu0 0.0
    %608 = vmatprep.subr.mxu0 0.0
    %609 = vmatpush1.msra.mxu0 0.0
    %610 = vmatprep.subr.mxu0 0.0
    %611 = vmatpush1.msra.mxu0 0.0
    %612 = vmatprep.subr.mxu0 0.0
    %613 = vmatpush1.msra.mxu0 0.0
    %614 = vmatprep.subr.mxu0 0.0
    %615 = vmatpush1.msra.mxu0 0.0
    %616 = vmatprep.subr.mxu0 0.0
    %617 = vmatpush1.msra.mxu0 0.0
    %618 = vmatprep.subr.mxu0 0.0
    %619 = vmatpush1.msra.mxu0 0.0
    %620 = vmatprep.subr.mxu0 0.0
    %621 = vmatpush1.msra.mxu0 0.0
    %622 = vmatprep.subr.mxu0 0.0
    %623 = vmatpush1.msra.mxu0 0.0
    %624 = vmatprep.subr.mxu0 0.0
    %625 = vmatpush1.msra.mxu0 0.0
    %626 = vmatprep.subr.mxu0 0.0
    %627 = vmatpush1.msra.mxu0 0.0
    %628 = vmatprep.subr.mxu0 0.0
    %629 = vmatpush1.msra.mxu0 0.0
    %630 = vmatprep.subr.mxu0 0.0
    %631 = vmatpush1.msra.mxu0 0.0
    %632 = vmatprep.subr.mxu0 0.0
    %633 = vmatpush1.msra.mxu0 0.0
    %634 = vmatprep.subr.mxu0 0.0
    %635 = vmatpush1.msra.mxu0 0.0
    %636 = vmatprep.subr.mxu0 0.0
    %637 = vmatpush1.msra.mxu0 0.0
    %638 = vmatprep.subr.mxu0 0.0
    %639 = vmatpush1.msra.mxu0 0.0
    %640 = vmatprep.mubr.f32.mxu0 0.0
    %641 = vmatmul.mubr.f32.gmra.mrb[0].mxu0 %v574
    %v642 = vpop.f32.mrb[0].mxu0
    %v643 = vadd.f32 0.0, %v642
    %v644 = vpop.f32.mrb[0].mxu0
    %645 = vdwg.mxu0
    %v646 = vadd.f32 %v569, %v643
    %v647 = vadd.f32 %v646, %v443
    %v648 = vxor.u32 %v647, 2147483648
    %v649 = vmul.f32 %v648, 1.442695
    %v650 = vpow.pop %v649
    %v651 = vadd.f32 %v650, 1.0
    %v652 = vrcp.pop %v651
    %v653 = vmul.f32 1.0, %v652
    %v654 = vtanh.pop %v647
    %v655 = vmul.f32 %v653, %v463
    %657 = vrot.lane.b32.xlu0 %v654, 64
    %v658 = vpop.permute.xlu0 %657
    %v660 = vmul.f32 %v653, %v658
    %662 = vrot.lane.b32.xlu0 %v660, 32
    %v663 = vpop.permute.xlu0 %662
    %v665 = vadd.f32 %v655, %v663
    %v666 = vtanh.pop %v665
    %668 = vrot.lane.b32.xlu0 %v666, 64
    %v669 = vpop.permute.xlu0 %668
    %v671 = vmul.f32 %v653, %v669
    %v672 = vadd.f32 %v223, %v567
    %v673 = vxor.u32 %v672, 2147483648
    %v674 = vmul.f32 %v673, 1.442695
    %v675 = vpow.pop %v674
    %v676 = vadd.f32 %v675, 1.0
    %v677 = vrcp.pop %v676
    %v678 = vmul.f32 1.0, %v677
    %v679 = vtanh.pop %v672
    %v680 = vmul.f32 %v678, %v488
    %682 = vrot.lane.b32.xlu0 %v679, 64
    %v683 = vpop.permute.xlu0 %682
    %v685 = vmul.f32 %v678, %v683
    %687 = vrot.lane.b32.xlu0 %v685, 32
    %v688 = vpop.permute.xlu0 %687
    %v690 = vadd.f32 %v680, %v688
    %v691 = vtanh.pop %v690
    %693 = vrot.lane.b32.xlu0 %v691, 64
    %v694 = vpop.permute.xlu0 %693
    %v696 = vmul.f32 %v678, %v694
    %698 = vrot.lane.b32.xlu0 %v696, 32
    %v699 = vpop.permute.xlu0 %698
    %v700 = vsel %vm291, %v699, 0
    %702 = vmatprep.subr.mxu0 %v252
    %703 = vmatpush1.msra.mxu0 %v251
    %704 = vmatprep.subr.mxu0 %v254
    %705 = vmatpush1.msra.mxu0 %v253
    %706 = vmatprep.subr.mxu0 %v256
    %707 = vmatpush1.msra.mxu0 %v255
    %708 = vmatprep.subr.mxu0 %v258
    %709 = vmatpush1.msra.mxu0 %v257
    %710 = vmatprep.subr.mxu0 0.0
    %711 = vmatpush1.msra.mxu0 0.0
    %712 = vmatprep.subr.mxu0 0.0
    %713 = vmatpush1.msra.mxu0 0.0
    %714 = vmatprep.subr.mxu0 0.0
    %715 = vmatpush1.msra.mxu0 0.0
    %716 = vmatprep.subr.mxu0 0.0
    %717 = vmatpush1.msra.mxu0 0.0
    %718 = vmatprep.subr.mxu0 0.0
    %719 = vmatpush1.msra.mxu0 0.0
    %720 = vmatprep.subr.mxu0 0.0
    %721 = vmatpush1.msra.mxu0 0.0
    %722 = vmatprep.subr.mxu0 0.0
    %723 = vmatpush1.msra.mxu0 0.0
    %724 = vmatprep.subr.mxu0 0.0
    %725 = vmatpush1.msra.mxu0 0.0
    %726 = vmatprep.subr.mxu0 0.0
    %727 = vmatpush1.msra.mxu0 0.0
    %728 = vmatprep.subr.mxu0 0.0
    %729 = vmatpush1.msra.mxu0 0.0
    %730 = vmatprep.subr.mxu0 0.0
    %731 = vmatpush1.msra.mxu0 0.0
    %732 = vmatprep.subr.mxu0 0.0
    %733 = vmatpush1.msra.mxu0 0.0
    %734 = vmatprep.subr.mxu0 0.0
    %735 = vmatpush1.msra.mxu0 0.0
    %736 = vmatprep.subr.mxu0 0.0
    %737 = vmatpush1.msra.mxu0 0.0
    %738 = vmatprep.subr.mxu0 0.0
    %739 = vmatpush1.msra.mxu0 0.0
    %740 = vmatprep.subr.mxu0 0.0
    %741 = vmatpush1.msra.mxu0 0.0
    %742 = vmatprep.subr.mxu0 0.0
    %743 = vmatpush1.msra.mxu0 0.0
    %744 = vmatprep.subr.mxu0 0.0
    %745 = vmatpush1.msra.mxu0 0.0
    %746 = vmatprep.subr.mxu0 0.0
    %747 = vmatpush1.msra.mxu0 0.0
    %748 = vmatprep.subr.mxu0 0.0
    %749 = vmatpush1.msra.mxu0 0.0
    %750 = vmatprep.subr.mxu0 0.0
    %751 = vmatpush1.msra.mxu0 0.0
    %752 = vmatprep.subr.mxu0 0.0
    %753 = vmatpush1.msra.mxu0 0.0
    %754 = vmatprep.subr.mxu0 0.0
    %755 = vmatpush1.msra.mxu0 0.0
    %756 = vmatprep.subr.mxu0 0.0
    %757 = vmatpush1.msra.mxu0 0.0
    %758 = vmatprep.subr.mxu0 0.0
    %759 = vmatpush1.msra.mxu0 0.0
    %760 = vmatprep.subr.mxu0 0.0
    %761 = vmatpush1.msra.mxu0 0.0
    %762 = vmatprep.subr.mxu0 0.0
    %763 = vmatpush1.msra.mxu0 0.0
    %764 = vmatprep.subr.mxu0 0.0
    %765 = vmatpush1.msra.mxu0 0.0
    %766 = vmatprep.mubr.f32.mxu0 0.0
    %767 = vmatmul.mubr.f32.gmra.mrb[0].mxu0 %v700
    %v768 = vpop.f32.mrb[0].mxu0
    %v769 = vadd.f32 0.0, %v768
    %v770 = vpop.f32.mrb[0].mxu0
    %v771 = vadd.f32 0.0, %v770
    %772 = vdwg.mxu0
    %774 = vrot.lane.b32.xlu0 %v671, 32
    %v775 = vpop.permute.xlu0 %774
    %v776 = vsel %vm291, %v775, 0
    %778 = vmatprep.subr.mxu0 0.0
    %779 = vmatpush1.msra.mxu0 %v259
    %780 = vmatprep.subr.mxu0 0.0
    %781 = vmatpush1.msra.mxu0 %v260
    %782 = vmatprep.subr.mxu0 0.0
    %783 = vmatpush1.msra.mxu0 %v261
    %784 = vmatprep.subr.mxu0 0.0
    %785 = vmatpush1.msra.mxu0 %v262
    %786 = vmatprep.subr.mxu0 0.0
    %787 = vmatpush1.msra.mxu0 0.0
    %788 = vmatprep.subr.mxu0 0.0
    %789 = vmatpush1.msra.mxu0 0.0
    %790 = vmatprep.subr.mxu0 0.0
    %791 = vmatpush1.msra.mxu0 0.0
    %792 = vmatprep.subr.mxu0 0.0
    %793 = vmatpush1.msra.mxu0 0.0
    %794 = vmatprep.subr.mxu0 0.0
    %795 = vmatpush1.msra.mxu0 0.0
    %796 = vmatprep.subr.mxu0 0.0
    %797 = vmatpush1.msra.mxu0 0.0
    %798 = vmatprep.subr.mxu0 0.0
    %799 = vmatpush1.msra.mxu0 0.0
    %800 = vmatprep.subr.mxu0 0.0
    %801 = vmatpush1.msra.mxu0 0.0
    %802 = vmatprep.subr.mxu0 0.0
    %803 = vmatpush1.msra.mxu0 0.0
    %804 = vmatprep.subr.mxu0 0.0
    %805 = vmatpush1.msra.mxu0 0.0
    %806 = vmatprep.subr.mxu0 0.0
    %807 = vmatpush1.msra.mxu0 0.0
    %808 = vmatprep.subr.mxu0 0.0
    %809 = vmatpush1.msra.mxu0 0.0
    %810 = vmatprep.subr.mxu0 0.0
    %811 = vmatpush1.msra.mxu0 0.0
    %812 = vmatprep.subr.mxu0 0.0
    %813 = vmatpush1.msra.mxu0 0.0
    %814 = vmatprep.subr.mxu0 0.0
    %815 = vmatpush1.msra.mxu0 0.0
    %816 = vmatprep.subr.mxu0 0.0
    %817 = vmatpush1.msra.mxu0 0.0
    %818 = vmatprep.subr.mxu0 0.0
    %819 = vmatpush1.msra.mxu0 0.0
    %820 = vmatprep.subr.mxu0 0.0
    %821 = vmatpush1.msra.mxu0 0.0
    %822 = vmatprep.subr.mxu0 0.0
    %823 = vmatpush1.msra.mxu0 0.0
    %824 = vmatprep.subr.mxu0 0.0
    %825 = vmatpush1.msra.mxu0 0.0
    %826 = vmatprep.subr.mxu0 0.0
    %827 = vmatpush1.msra.mxu0 0.0
    %828 = vmatprep.subr.mxu0 0.0
    %829 = vmatpush1.msra.mxu0 0.0
    %830 = vmatprep.subr.mxu0 0.0
    %831 = vmatpush1.msra.mxu0 0.0
    %832 = vmatprep.subr.mxu0 0.0
    %833 = vmatpush1.msra.mxu0 0.0
    %834 = vmatprep.subr.mxu0 0.0
    %835 = vmatpush1.msra.mxu0 0.0
    %836 = vmatprep.subr.mxu0 0.0
    %837 = vmatpush1.msra.mxu0 0.0
    %838 = vmatprep.subr.mxu0 0.0
    %839 = vmatpush1.msra.mxu0 0.0
    %840 = vmatprep.subr.mxu0 0.0
    %841 = vmatpush1.msra.mxu0 0.0
    %842 = vmatprep.mubr.f32.mxu0 0.0
    %843 = vmatmul.mubr.f32.gmra.mrb[0].mxu0 %v776
    %v844 = vpop.f32.mrb[0].mxu0
    %v845 = vadd.f32 0.0, %v844
    %v846 = vpop.f32.mrb[0].mxu0
    %847 = vdwg.mxu0
    %v848 = vadd.f32 %v771, %v845
    %v849 = vadd.f32 %v848, %v443
    %v850 = vxor.u32 %v849, 2147483648
    %v851 = vmul.f32 %v850, 1.442695
    %v852 = vpow.pop %v851
    %v853 = vadd.f32 %v852, 1.0
    %v854 = vrcp.pop %v853
    %v855 = vmul.f32 1.0, %v854
    %v856 = vtanh.pop %v849
    %v857 = vmul.f32 %v855, %v665
    %859 = vrot.lane.b32.xlu0 %v856, 64
    %v860 = vpop.permute.xlu0 %859
    %v862 = vmul.f32 %v855, %v860
    %864 = vrot.lane.b32.xlu0 %v862, 32
    %v865 = vpop.permute.xlu0 %864
    %v867 = vadd.f32 %v857, %v865
    %v868 = vtanh.pop %v867
    %870 = vrot.lane.b32.xlu0 %v868, 64
    %v871 = vpop.permute.xlu0 %870
    %v873 = vmul.f32 %v855, %v871
    %v874 = vadd.f32 %v228, %v769
    %v875 = vxor.u32 %v874, 2147483648
    %v876 = vmul.f32 %v875, 1.442695
    %v877 = vpow.pop %v876
    %v878 = vadd.f32 %v877, 1.0
    %v879 = vrcp.pop %v878
    %v880 = vmul.f32 1.0, %v879
    %v881 = vtanh.pop %v874
    %v882 = vmul.f32 %v880, %v690
    %884 = vrot.lane.b32.xlu0 %v881, 64
    %v885 = vpop.permute.xlu0 %884
    %v887 = vmul.f32 %v880, %v885
    %889 = vrot.lane.b32.xlu0 %v887, 32
    %v890 = vpop.permute.xlu0 %889
    %v892 = vadd.f32 %v882, %v890
    %v893 = vtanh.pop %v892
    %895 = vrot.lane.b32.xlu0 %v893, 64
    %v896 = vpop.permute.xlu0 %895
    %v898 = vmul.f32 %v880, %v896
    %900 = vrot.lane.b32.xlu0 %v898, 32
    %v901 = vpop.permute.xlu0 %900
    %v902 = vsel %vm291, %v901, 0
    %904 = vmatprep.subr.mxu0 %v252
    %905 = vmatpush1.msra.mxu0 %v251
    %906 = vmatprep.subr.mxu0 %v254
    %907 = vmatpush1.msra.mxu0 %v253
    %908 = vmatprep.subr.mxu0 %v256
    %909 = vmatpush1.msra.mxu0 %v255
    %910 = vmatprep.subr.mxu0 %v258
    %911 = vmatpush1.msra.mxu0 %v257
    %912 = vmatprep.subr.mxu0 0.0
    %913 = vmatpush1.msra.mxu0 0.0
    %914 = vmatprep.subr.mxu0 0.0
    %915 = vmatpush1.msra.mxu0 0.0
    %916 = vmatprep.subr.mxu0 0.0
    %917 = vmatpush1.msra.mxu0 0.0
    %918 = vmatprep.subr.mxu0 0.0
    %919 = vmatpush1.msra.mxu0 0.0
    %920 = vmatprep.subr.mxu0 0.0
    %921 = vmatpush1.msra.mxu0 0.0
    %922 = vmatprep.subr.mxu0 0.0
    %923 = vmatpush1.msra.mxu0 0.0
    %924 = vmatprep.subr.mxu0 0.0
    %925 = vmatpush1.msra.mxu0 0.0
    %926 = vmatprep.subr.mxu0 0.0
    %927 = vmatpush1.msra.mxu0 0.0
    %928 = vmatprep.subr.mxu0 0.0
    %929 = vmatpush1.msra.mxu0 0.0
    %930 = vmatprep.subr.mxu0 0.0
    %931 = vmatpush1.msra.mxu0 0.0
    %932 = vmatprep.subr.mxu0 0.0
    %933 = vmatpush1.msra.mxu0 0.0
    %934 = vmatprep.subr.mxu0 0.0
    %935 = vmatpush1.msra.mxu0 0.0
    %936 = vmatprep.subr.mxu0 0.0
    %937 = vmatpush1.msra.mxu0 0.0
    %938 = vmatprep.subr.mxu0 0.0
    %939 = vmatpush1.msra.mxu0 0.0
    %940 = vmatprep.subr.mxu0 0.0
    %941 = vmatpush1.msra.mxu0 0.0
    %942 = vmatprep.subr.mxu0 0.0
    %943 = vmatpush1.msra.mxu0 0.0
    %944 = vmatprep.subr.mxu0 0.0
    %945 = vmatpush1.msra.mxu0 0.0
    %946 = vmatprep.subr.mxu0 0.0
    %947 = vmatpush1.msra.mxu0 0.0
    %948 = vmatprep.subr.mxu0 0.0
    %949 = vmatpush1.msra.mxu0 0.0
    %950 = vmatprep.subr.mxu0 0.0
    %951 = vmatpush1.msra.mxu0 0.0
    %952 = vmatprep.subr.mxu0 0.0
    %953 = vmatpush1.msra.mxu0 0.0
    %954 = vmatprep.subr.mxu0 0.0
    %955 = vmatpush1.msra.mxu0 0.0
    %956 = vmatprep.subr.mxu0 0.0
    %957 = vmatpush1.msra.mxu0 0.0
    %958 = vmatprep.subr.mxu0 0.0
    %959 = vmatpush1.msra.mxu0 0.0
    %960 = vmatprep.subr.mxu0 0.0
    %961 = vmatpush1.msra.mxu0 0.0
    %962 = vmatprep.subr.mxu0 0.0
    %963 = vmatpush1.msra.mxu0 0.0
    %964 = vmatprep.subr.mxu0 0.0
    %965 = vmatpush1.msra.mxu0 0.0
    %966 = vmatprep.subr.mxu0 0.0
    %967 = vmatpush1.msra.mxu0 0.0
    %968 = vmatprep.mubr.f32.mxu0 0.0
    %969 = vmatmul.mubr.f32.gmra.mrb[0].mxu0 %v902
    %v970 = vpop.f32.mrb[0].mxu0
    %v971 = vadd.f32 0.0, %v970
    %v972 = vpop.f32.mrb[0].mxu0
    %v973 = vadd.f32 0.0, %v972
    %974 = vdwg.mxu0
    %976 = vrot.lane.b32.xlu0 %v873, 32
    %v977 = vpop.permute.xlu0 %976
    %v978 = vsel %vm291, %v977, 0
    %980 = vmatprep.subr.mxu0 0.0
    %981 = vmatpush1.msra.mxu0 %v259
    %982 = vmatprep.subr.mxu0 0.0
    %983 = vmatpush1.msra.mxu0 %v260
    %984 = vmatprep.subr.mxu0 0.0
    %985 = vmatpush1.msra.mxu0 %v261
    %986 = vmatprep.subr.mxu0 0.0
    %987 = vmatpush1.msra.mxu0 %v262
    %988 = vmatprep.subr.mxu0 0.0
    %989 = vmatpush1.msra.mxu0 0.0
    %990 = vmatprep.subr.mxu0 0.0
    %991 = vmatpush1.msra.mxu0 0.0
    %992 = vmatprep.subr.mxu0 0.0
    %993 = vmatpush1.msra.mxu0 0.0
    %994 = vmatprep.subr.mxu0 0.0
    %995 = vmatpush1.msra.mxu0 0.0
    %996 = vmatprep.subr.mxu0 0.0
    %997 = vmatpush1.msra.mxu0 0.0
    %998 = vmatprep.subr.mxu0 0.0
    %999 = vmatpush1.msra.mxu0 0.0
    %1000 = vmatprep.subr.mxu0 0.0
    %1001 = vmatpush1.msra.mxu0 0.0
    %1002 = vmatprep.subr.mxu0 0.0
    %1003 = vmatpush1.msra.mxu0 0.0
    %1004 = vmatprep.subr.mxu0 0.0
    %1005 = vmatpush1.msra.mxu0 0.0
    %1006 = vmatprep.subr.mxu0 0.0
    %1007 = vmatpush1.msra.mxu0 0.0
    %1008 = vmatprep.subr.mxu0 0.0
    %1009 = vmatpush1.msra.mxu0 0.0
    %1010 = vmatprep.subr.mxu0 0.0
    %1011 = vmatpush1.msra.mxu0 0.0
    %1012 = vmatprep.subr.mxu0 0.0
    %1013 = vmatpush1.msra.mxu0 0.0
    %1014 = vmatprep.subr.mxu0 0.0
    %1015 = vmatpush1.msra.mxu0 0.0
    %1016 = vmatprep.subr.mxu0 0.0
    %1017 = vmatpush1.msra.mxu0 0.0
    %1018 = vmatprep.subr.mxu0 0.0
    %1019 = vmatpush1.msra.mxu0 0.0
    %1020 = vmatprep.subr.mxu0 0.0
    %1021 = vmatpush1.msra.mxu0 0.0
    %1022 = vmatprep.subr.mxu0 0.0
    %1023 = vmatpush1.msra.mxu0 0.0
    %1024 = vmatprep.subr.mxu0 0.0
    %1025 = vmatpush1.msra.mxu0 0.0
    %1026 = vmatprep.subr.mxu0 0.0
    %1027 = vmatpush1.msra.mxu0 0.0
    %1028 = vmatprep.subr.mxu0 0.0
    %1029 = vmatpush1.msra.mxu0 0.0
    %1030 = vmatprep.subr.mxu0 0.0
    %1031 = vmatpush1.msra.mxu0 0.0
    %1032 = vmatprep.subr.mxu0 0.0
    %1033 = vmatpush1.msra.mxu0 0.0
    %1034 = vmatprep.subr.mxu0 0.0
    %1035 = vmatpush1.msra.mxu0 0.0
    %1036 = vmatprep.subr.mxu0 0.0
    %1037 = vmatpush1.msra.mxu0 0.0
    %1038 = vmatprep.subr.mxu0 0.0
    %1039 = vmatpush1.msra.mxu0 0.0
    %1040 = vmatprep.subr.mxu0 0.0
    %1041 = vmatpush1.msra.mxu0 0.0
    %1042 = vmatprep.subr.mxu0 0.0
    %1043 = vmatpush1.msra.mxu0 0.0
    %1044 = vmatprep.mubr.f32.mxu0 0.0
    %1045 = vmatmul.mubr.f32.gmra.mrb[0].mxu0 %v978
    %v1046 = vpop.f32.mrb[0].mxu0
    %v1047 = vadd.f32 0.0, %v1046
    %v1048 = vpop.f32.mrb[0].mxu0
    %1049 = vdwg.mxu0
    %v1050 = vadd.f32 %v973, %v1047
    %v1051 = vadd.f32 %v1050, %v443
    %v1052 = vxor.u32 %v1051, 2147483648
    %v1053 = vmul.f32 %v1052, 1.442695
    %v1054 = vpow.pop %v1053
    %v1055 = vadd.f32 %v1054, 1.0
    %v1056 = vrcp.pop %v1055
    %v1057 = vmul.f32 1.0, %v1056
    %v1058 = vtanh.pop %v1051
    %v1059 = vmul.f32 %v1057, %v867
    %1061 = vrot.lane.b32.xlu0 %v1058, 64
    %v1062 = vpop.permute.xlu0 %1061
    %v1064 = vmul.f32 %v1057, %v1062
    %1066 = vrot.lane.b32.xlu0 %v1064, 32
    %v1067 = vpop.permute.xlu0 %1066
    %v1069 = vadd.f32 %v1059, %v1067
    %v1070 = vtanh.pop %v1069
    %1072 = vrot.lane.b32.xlu0 %v1070, 64
    %v1073 = vpop.permute.xlu0 %1072
    %v1075 = vmul.f32 %v1057, %v1073
    %v1076 = vadd.f32 %v233, %v971
    %v1077 = vxor.u32 %v1076, 2147483648
    %v1078 = vmul.f32 %v1077, 1.442695
    %v1079 = vpow.pop %v1078
    %v1080 = vadd.f32 %v1079, 1.0
    %v1081 = vrcp.pop %v1080
    %v1082 = vmul.f32 1.0, %v1081
    %v1083 = vtanh.pop %v1076
    %v1084 = vmul.f32 %v1082, %v892
    %1086 = vrot.lane.b32.xlu0 %v1083, 64
    %v1087 = vpop.permute.xlu0 %1086
    %v1089 = vmul.f32 %v1082, %v1087
    %1091 = vrot.lane.b32.xlu0 %v1089, 32
    %v1092 = vpop.permute.xlu0 %1091
    %v1094 = vadd.f32 %v1084, %v1092
    %v1095 = vtanh.pop %v1094
    %1097 = vrot.lane.b32.xlu0 %v1095, 64
    %v1098 = vpop.permute.xlu0 %1097
    %v1100 = vmul.f32 %v1082, %v1098
    %1102 = vrot.lane.b32.xlu0 %v1100, 32
    %v1103 = vpop.permute.xlu0 %1102
    %v1104 = vsel %vm291, %v1103, 0
    %1106 = vmatprep.subr.mxu0 %v252
    %1107 = vmatpush1.msra.mxu0 %v251
    %1108 = vmatprep.subr.mxu0 %v254
    %1109 = vmatpush1.msra.mxu0 %v253
    %1110 = vmatprep.subr.mxu0 %v256
    %1111 = vmatpush1.msra.mxu0 %v255
    %1112 = vmatprep.subr.mxu0 %v258
    %1113 = vmatpush1.msra.mxu0 %v257
    %1114 = vmatprep.subr.mxu0 0.0
    %1115 = vmatpush1.msra.mxu0 0.0
    %1116 = vmatprep.subr.mxu0 0.0
    %1117 = vmatpush1.msra.mxu0 0.0
    %1118 = vmatprep.subr.mxu0 0.0
    %1119 = vmatpush1.msra.mxu0 0.0
    %1120 = vmatprep.subr.mxu0 0.0
    %1121 = vmatpush1.msra.mxu0 0.0
    %1122 = vmatprep.subr.mxu0 0.0
    %1123 = vmatpush1.msra.mxu0 0.0
    %1124 = vmatprep.subr.mxu0 0.0
    %1125 = vmatpush1.msra.mxu0 0.0
    %1126 = vmatprep.subr.mxu0 0.0
    %1127 = vmatpush1.msra.mxu0 0.0
    %1128 = vmatprep.subr.mxu0 0.0
    %1129 = vmatpush1.msra.mxu0 0.0
    %1130 = vmatprep.subr.mxu0 0.0
    %1131 = vmatpush1.msra.mxu0 0.0
    %1132 = vmatprep.subr.mxu0 0.0
    %1133 = vmatpush1.msra.mxu0 0.0
    %1134 = vmatprep.subr.mxu0 0.0
    %1135 = vmatpush1.msra.mxu0 0.0
    %1136 = vmatprep.subr.mxu0 0.0
    %1137 = vmatpush1.msra.mxu0 0.0
    %1138 = vmatprep.subr.mxu0 0.0
    %1139 = vmatpush1.msra.mxu0 0.0
    %1140 = vmatprep.subr.mxu0 0.0
    %1141 = vmatpush1.msra.mxu0 0.0
    %1142 = vmatprep.subr.mxu0 0.0
    %1143 = vmatpush1.msra.mxu0 0.0
    %1144 = vmatprep.subr.mxu0 0.0
    %1145 = vmatpush1.msra.mxu0 0.0
    %1146 = vmatprep.subr.mxu0 0.0
    %1147 = vmatpush1.msra.mxu0 0.0
    %1148 = vmatprep.subr.mxu0 0.0
    %1149 = vmatpush1.msra.mxu0 0.0
    %1150 = vmatprep.subr.mxu0 0.0
    %1151 = vmatpush1.msra.mxu0 0.0
    %1152 = vmatprep.subr.mxu0 0.0
    %1153 = vmatpush1.msra.mxu0 0.0
    %1154 = vmatprep.subr.mxu0 0.0
    %1155 = vmatpush1.msra.mxu0 0.0
    %1156 = vmatprep.subr.mxu0 0.0
    %1157 = vmatpush1.msra.mxu0 0.0
    %1158 = vmatprep.subr.mxu0 0.0
    %1159 = vmatpush1.msra.mxu0 0.0
    %1160 = vmatprep.subr.mxu0 0.0
    %1161 = vmatpush1.msra.mxu0 0.0
    %1162 = vmatprep.subr.mxu0 0.0
    %1163 = vmatpush1.msra.mxu0 0.0
    %1164 = vmatprep.subr.mxu0 0.0
    %1165 = vmatpush1.msra.mxu0 0.0
    %1166 = vmatprep.subr.mxu0 0.0
    %1167 = vmatpush1.msra.mxu0 0.0
    %1168 = vmatprep.subr.mxu0 0.0
    %1169 = vmatpush1.msra.mxu0 0.0
    %1170 = vmatprep.mubr.f32.mxu0 0.0
    %1171 = vmatmul.mubr.f32.gmra.mrb[0].mxu0 %v1104
    %v1172 = vpop.f32.mrb[0].mxu0
    %v1173 = vadd.f32 0.0, %v1172
    %v1174 = vpop.f32.mrb[0].mxu0
    %v1175 = vadd.f32 0.0, %v1174
    %1176 = vdwg.mxu0
    %1178 = vrot.lane.b32.xlu0 %v1075, 32
    %v1179 = vpop.permute.xlu0 %1178
    %v1180 = vsel %vm291, %v1179, 0
    %1182 = vmatprep.subr.mxu0 0.0
    %1183 = vmatpush1.msra.mxu0 %v259
    %1184 = vmatprep.subr.mxu0 0.0
    %1185 = vmatpush1.msra.mxu0 %v260
    %1186 = vmatprep.subr.mxu0 0.0
    %1187 = vmatpush1.msra.mxu0 %v261
    %1188 = vmatprep.subr.mxu0 0.0
    %1189 = vmatpush1.msra.mxu0 %v262
    %1190 = vmatprep.subr.mxu0 0.0
    %1191 = vmatpush1.msra.mxu0 0.0
    %1192 = vmatprep.subr.mxu0 0.0
    %1193 = vmatpush1.msra.mxu0 0.0
    %1194 = vmatprep.subr.mxu0 0.0
    %1195 = vmatpush1.msra.mxu0 0.0
    %1196 = vmatprep.subr.mxu0 0.0
    %1197 = vmatpush1.msra.mxu0 0.0
    %1198 = vmatprep.subr.mxu0 0.0
    %1199 = vmatpush1.msra.mxu0 0.0
    %1200 = vmatprep.subr.mxu0 0.0
    %1201 = vmatpush1.msra.mxu0 0.0
    %1202 = vmatprep.subr.mxu0 0.0
    %1203 = vmatpush1.msra.mxu0 0.0
    %1204 = vmatprep.subr.mxu0 0.0
    %1205 = vmatpush1.msra.mxu0 0.0
    %1206 = vmatprep.subr.mxu0 0.0
    %1207 = vmatpush1.msra.mxu0 0.0
    %1208 = vmatprep.subr.mxu0 0.0
    %1209 = vmatpush1.msra.mxu0 0.0
    %1210 = vmatprep.subr.mxu0 0.0
    %1211 = vmatpush1.msra.mxu0 0.0
    %1212 = vmatprep.subr.mxu0 0.0
    %1213 = vmatpush1.msra.mxu0 0.0
    %1214 = vmatprep.subr.mxu0 0.0
    %1215 = vmatpush1.msra.mxu0 0.0
    %1216 = vmatprep.subr.mxu0 0.0
    %1217 = vmatpush1.msra.mxu0 0.0
    %1218 = vmatprep.subr.mxu0 0.0
    %1219 = vmatpush1.msra.mxu0 0.0
    %1220 = vmatprep.subr.mxu0 0.0
    %1221 = vmatpush1.msra.mxu0 0.0
    %1222 = vmatprep.subr.mxu0 0.0
    %1223 = vmatpush1.msra.mxu0 0.0
    %1224 = vmatprep.subr.mxu0 0.0
    %1225 = vmatpush1.msra.mxu0 0.0
    %1226 = vmatprep.subr.mxu0 0.0
    %1227 = vmatpush1.msra.mxu0 0.0
    %1228 = vmatprep.subr.mxu0 0.0
    %1229 = vmatpush1.msra.mxu0 0.0
    %1230 = vmatprep.subr.mxu0 0.0
    %1231 = vmatpush1.msra.mxu0 0.0
    %1232 = vmatprep.subr.mxu0 0.0
    %1233 = vmatpush1.msra.mxu0 0.0
    %1234 = vmatprep.subr.mxu0 0.0
    %1235 = vmatpush1.msra.mxu0 0.0
    %1236 = vmatprep.subr.mxu0 0.0
    %1237 = vmatpush1.msra.mxu0 0.0
    %1238 = vmatprep.subr.mxu0 0.0
    %1239 = vmatpush1.msra.mxu0 0.0
    %1240 = vmatprep.subr.mxu0 0.0
    %1241 = vmatpush1.msra.mxu0 0.0
    %1242 = vmatprep.subr.mxu0 0.0
    %1243 = vmatpush1.msra.mxu0 0.0
    %1244 = vmatprep.subr.mxu0 0.0
    %1245 = vmatpush1.msra.mxu0 0.0
    %1246 = vmatprep.mubr.f32.mxu0 0.0
    %1247 = vmatmul.mubr.f32.gmra.mrb[0].mxu0 %v1180
    %v1248 = vpop.f32.mrb[0].mxu0
    %v1249 = vadd.f32 0.0, %v1248
    %v1250 = vpop.f32.mrb[0].mxu0
    %1251 = vdwg.mxu0
    %v1252 = vadd.f32 %v1175, %v1249
    %v1253 = vadd.f32 %v1252, %v443
    %v1254 = vxor.u32 %v1253, 2147483648
    %v1255 = vmul.f32 %v1254, 1.442695
    %v1256 = vpow.pop %v1255
    %v1257 = vadd.f32 %v1256, 1.0
    %v1258 = vrcp.pop %v1257
    %v1259 = vmul.f32 1.0, %v1258
    %v1260 = vtanh.pop %v1253
    %v1261 = vmul.f32 %v1259, %v1069
    %1263 = vrot.lane.b32.xlu0 %v1260, 64
    %v1264 = vpop.permute.xlu0 %1263
    %v1266 = vmul.f32 %v1259, %v1264
    %1268 = vrot.lane.b32.xlu0 %v1266, 32
    %v1269 = vpop.permute.xlu0 %1268
    %v1271 = vadd.f32 %v1261, %v1269
    %v1272 = vtanh.pop %v1271
    %1274 = vrot.lane.b32.xlu0 %v1272, 64
    %v1275 = vpop.permute.xlu0 %1274
    %v1277 = vmul.f32 %v1259, %v1275
    %v1278 = vadd.f32 %v238, %v1173
    %v1279 = vxor.u32 %v1278, 2147483648
    %v1280 = vmul.f32 %v1279, 1.442695
    %v1281 = vpow.pop %v1280
    %v1282 = vadd.f32 %v1281, 1.0
    %v1283 = vrcp.pop %v1282
    %v1284 = vmul.f32 1.0, %v1283
    %v1285 = vtanh.pop %v1278
    %v1286 = vmul.f32 %v1284, %v1094
    %1288 = vrot.lane.b32.xlu0 %v1285, 64
    %v1289 = vpop.permute.xlu0 %1288
    %v1291 = vmul.f32 %v1284, %v1289
    %1293 = vrot.lane.b32.xlu0 %v1291, 32
    %v1294 = vpop.permute.xlu0 %1293
    %v1296 = vadd.f32 %v1286, %v1294
    %v1297 = vtanh.pop %v1296
    %1299 = vrot.lane.b32.xlu0 %v1297, 64
    %v1300 = vpop.permute.xlu0 %1299
    %v1302 = vmul.f32 %v1284, %v1300
    %1304 = vrot.lane.b32.xlu0 %v1302, 32
    %v1305 = vpop.permute.xlu0 %1304
    %v1306 = vsel %vm291, %v1305, 0
    %1308 = vmatprep.subr.mxu0 %v252
    %1309 = vmatpush1.msra.mxu0 %v251
    %1310 = vmatprep.subr.mxu0 %v254
    %1311 = vmatpush1.msra.mxu0 %v253
    %1312 = vmatprep.subr.mxu0 %v256
    %1313 = vmatpush1.msra.mxu0 %v255
    %1314 = vmatprep.subr.mxu0 %v258
    %1315 = vmatpush1.msra.mxu0 %v257
    %1316 = vmatprep.subr.mxu0 0.0
    %1317 = vmatpush1.msra.mxu0 0.0
    %1318 = vmatprep.subr.mxu0 0.0
    %1319 = vmatpush1.msra.mxu0 0.0
    %1320 = vmatprep.subr.mxu0 0.0
    %1321 = vmatpush1.msra.mxu0 0.0
    %1322 = vmatprep.subr.mxu0 0.0
    %1323 = vmatpush1.msra.mxu0 0.0
    %1324 = vmatprep.subr.mxu0 0.0
    %1325 = vmatpush1.msra.mxu0 0.0
    %1326 = vmatprep.subr.mxu0 0.0
    %1327 = vmatpush1.msra.mxu0 0.0
    %1328 = vmatprep.subr.mxu0 0.0
    %1329 = vmatpush1.msra.mxu0 0.0
    %1330 = vmatprep.subr.mxu0 0.0
    %1331 = vmatpush1.msra.mxu0 0.0
    %1332 = vmatprep.subr.mxu0 0.0
    %1333 = vmatpush1.msra.mxu0 0.0
    %1334 = vmatprep.subr.mxu0 0.0
    %1335 = vmatpush1.msra.mxu0 0.0
    %1336 = vmatprep.subr.mxu0 0.0
    %1337 = vmatpush1.msra.mxu0 0.0
    %1338 = vmatprep.subr.mxu0 0.0
    %1339 = vmatpush1.msra.mxu0 0.0
    %1340 = vmatprep.subr.mxu0 0.0
    %1341 = vmatpush1.msra.mxu0 0.0
    %1342 = vmatprep.subr.mxu0 0.0
    %1343 = vmatpush1.msra.mxu0 0.0
    %1344 = vmatprep.subr.mxu0 0.0
    %1345 = vmatpush1.msra.mxu0 0.0
    %1346 = vmatprep.subr.mxu0 0.0
    %1347 = vmatpush1.msra.mxu0 0.0
    %1348 = vmatprep.subr.mxu0 0.0
    %1349 = vmatpush1.msra.mxu0 0.0
    %1350 = vmatprep.subr.mxu0 0.0
    %1351 = vmatpush1.msra.mxu0 0.0
    %1352 = vmatprep.subr.mxu0 0.0
    %1353 = vmatpush1.msra.mxu0 0.0
    %1354 = vmatprep.subr.mxu0 0.0
    %1355 = vmatpush1.msra.mxu0 0.0
    %1356 = vmatprep.subr.mxu0 0.0
    %1357 = vmatpush1.msra.mxu0 0.0
    %1358 = vmatprep.subr.mxu0 0.0
    %1359 = vmatpush1.msra.mxu0 0.0
    %1360 = vmatprep.subr.mxu0 0.0
    %1361 = vmatpush1.msra.mxu0 0.0
    %1362 = vmatprep.subr.mxu0 0.0
    %1363 = vmatpush1.msra.mxu0 0.0
    %1364 = vmatprep.subr.mxu0 0.0
    %1365 = vmatpush1.msra.mxu0 0.0
    %1366 = vmatprep.subr.mxu0 0.0
    %1367 = vmatpush1.msra.mxu0 0.0
    %1368 = vmatprep.subr.mxu0 0.0
    %1369 = vmatpush1.msra.mxu0 0.0
    %1370 = vmatprep.subr.mxu0 0.0
    %1371 = vmatpush1.msra.mxu0 0.0
    %1372 = vmatprep.mubr.f32.mxu0 0.0
    %1373 = vmatmul.mubr.f32.gmra.mrb[0].mxu0 %v1306
    %v1374 = vpop.f32.mrb[0].mxu0
    %v1375 = vadd.f32 0.0, %v1374
    %v1376 = vpop.f32.mrb[0].mxu0
    %v1377 = vadd.f32 0.0, %v1376
    %1378 = vdwg.mxu0
    %1380 = vrot.lane.b32.xlu0 %v1277, 32
    %v1381 = vpop.permute.xlu0 %1380
    %v1382 = vsel %vm291, %v1381, 0
    %1384 = vmatprep.subr.mxu0 0.0
    %1385 = vmatpush1.msra.mxu0 %v259
    %1386 = vmatprep.subr.mxu0 0.0
    %1387 = vmatpush1.msra.mxu0 %v260
    %1388 = vmatprep.subr.mxu0 0.0
    %1389 = vmatpush1.msra.mxu0 %v261
    %1390 = vmatprep.subr.mxu0 0.0
    %1391 = vmatpush1.msra.mxu0 %v262
    %1392 = vmatprep.subr.mxu0 0.0
    %1393 = vmatpush1.msra.mxu0 0.0
    %1394 = vmatprep.subr.mxu0 0.0
    %1395 = vmatpush1.msra.mxu0 0.0
    %1396 = vmatprep.subr.mxu0 0.0
    %1397 = vmatpush1.msra.mxu0 0.0
    %1398 = vmatprep.subr.mxu0 0.0
    %1399 = vmatpush1.msra.mxu0 0.0
    %1400 = vmatprep.subr.mxu0 0.0
    %1401 = vmatpush1.msra.mxu0 0.0
    %1402 = vmatprep.subr.mxu0 0.0
    %1403 = vmatpush1.msra.mxu0 0.0
    %1404 = vmatprep.subr.mxu0 0.0
    %1405 = vmatpush1.msra.mxu0 0.0
    %1406 = vmatprep.subr.mxu0 0.0
    %1407 = vmatpush1.msra.mxu0 0.0
    %1408 = vmatprep.subr.mxu0 0.0
    %1409 = vmatpush1.msra.mxu0 0.0
    %1410 = vmatprep.subr.mxu0 0.0
    %1411 = vmatpush1.msra.mxu0 0.0
    %1412 = vmatprep.subr.mxu0 0.0
    %1413 = vmatpush1.msra.mxu0 0.0
    %1414 = vmatprep.subr.mxu0 0.0
    %1415 = vmatpush1.msra.mxu0 0.0
    %1416 = vmatprep.subr.mxu0 0.0
    %1417 = vmatpush1.msra.mxu0 0.0
    %1418 = vmatprep.subr.mxu0 0.0
    %1419 = vmatpush1.msra.mxu0 0.0
    %1420 = vmatprep.subr.mxu0 0.0
    %1421 = vmatpush1.msra.mxu0 0.0
    %1422 = vmatprep.subr.mxu0 0.0
    %1423 = vmatpush1.msra.mxu0 0.0
    %1424 = vmatprep.subr.mxu0 0.0
    %1425 = vmatpush1.msra.mxu0 0.0
    %1426 = vmatprep.subr.mxu0 0.0
    %1427 = vmatpush1.msra.mxu0 0.0
    %1428 = vmatprep.subr.mxu0 0.0
    %1429 = vmatpush1.msra.mxu0 0.0
    %1430 = vmatprep.subr.mxu0 0.0
    %1431 = vmatpush1.msra.mxu0 0.0
    %1432 = vmatprep.subr.mxu0 0.0
    %1433 = vmatpush1.msra.mxu0 0.0
    %1434 = vmatprep.subr.mxu0 0.0
    %1435 = vmatpush1.msra.mxu0 0.0
    %1436 = vmatprep.subr.mxu0 0.0
    %1437 = vmatpush1.msra.mxu0 0.0
    %1438 = vmatprep.subr.mxu0 0.0
    %1439 = vmatpush1.msra.mxu0 0.0
    %1440 = vmatprep.subr.mxu0 0.0
    %1441 = vmatpush1.msra.mxu0 0.0
    %1442 = vmatprep.subr.mxu0 0.0
    %1443 = vmatpush1.msra.mxu0 0.0
    %1444 = vmatprep.subr.mxu0 0.0
    %1445 = vmatpush1.msra.mxu0 0.0
    %1446 = vmatprep.subr.mxu0 0.0
    %1447 = vmatpush1.msra.mxu0 0.0
    %1448 = vmatprep.mubr.f32.mxu0 0.0
    %1449 = vmatmul.mubr.f32.gmra.mrb[0].mxu0 %v1382
    %v1450 = vpop.f32.mrb[0].mxu0
    %v1451 = vadd.f32 0.0, %v1450
    %v1452 = vpop.f32.mrb[0].mxu0
    %1453 = vdwg.mxu0
    %v1454 = vadd.f32 %v1377, %v1451
    %v1455 = vadd.f32 %v1454, %v443
    %v1456 = vxor.u32 %v1455, 2147483648
    %v1457 = vmul.f32 %v1456, 1.442695
    %v1458 = vpow.pop %v1457
    %v1459 = vadd.f32 %v1458, 1.0
    %v1460 = vrcp.pop %v1459
    %v1461 = vmul.f32 1.0, %v1460
    %v1462 = vtanh.pop %v1455
    %v1463 = vmul.f32 %v1461, %v1271
    %1465 = vrot.lane.b32.xlu0 %v1462, 64
    %v1466 = vpop.permute.xlu0 %1465
    %v1468 = vmul.f32 %v1461, %v1466
    %1470 = vrot.lane.b32.xlu0 %v1468, 32
    %v1471 = vpop.permute.xlu0 %1470
    %v1473 = vadd.f32 %v1463, %v1471
    %v1474 = vtanh.pop %v1473
    %1476 = vrot.lane.b32.xlu0 %v1474, 64
    %v1477 = vpop.permute.xlu0 %1476
    %v1479 = vmul.f32 %v1461, %v1477
    %v1480 = vadd.f32 %v243, %v1375
    %v1481 = vxor.u32 %v1480, 2147483648
    %v1482 = vmul.f32 %v1481, 1.442695
    %v1483 = vpow.pop %v1482
    %v1484 = vadd.f32 %v1483, 1.0
    %v1485 = vrcp.pop %v1484
    %v1486 = vmul.f32 1.0, %v1485
    %v1487 = vtanh.pop %v1480
    %v1488 = vmul.f32 %v1486, %v1296
    %1490 = vrot.lane.b32.xlu0 %v1487, 64
    %v1491 = vpop.permute.xlu0 %1490
    %v1493 = vmul.f32 %v1486, %v1491
    %1495 = vrot.lane.b32.xlu0 %v1493, 32
    %v1496 = vpop.permute.xlu0 %1495
    %v1498 = vadd.f32 %v1488, %v1496
    %v1499 = vtanh.pop %v1498
    %1501 = vrot.lane.b32.xlu0 %v1499, 64
    %v1502 = vpop.permute.xlu0 %1501
    %v1504 = vmul.f32 %v1486, %v1502
    %1506 = vrot.lane.b32.xlu0 %v1504, 32
    %v1507 = vpop.permute.xlu0 %1506
    %v1508 = vsel %vm291, %v1507, 0
    %1510 = vmatprep.subr.mxu0 %v252
    %1511 = vmatpush1.msra.mxu0 %v251
    %1512 = vmatprep.subr.mxu0 %v254
    %1513 = vmatpush1.msra.mxu0 %v253
    %1514 = vmatprep.subr.mxu0 %v256
    %1515 = vmatpush1.msra.mxu0 %v255
    %1516 = vmatprep.subr.mxu0 %v258
    %1517 = vmatpush1.msra.mxu0 %v257
    %1518 = vmatprep.subr.mxu0 0.0
    %1519 = vmatpush1.msra.mxu0 0.0
    %1520 = vmatprep.subr.mxu0 0.0
    %1521 = vmatpush1.msra.mxu0 0.0
    %1522 = vmatprep.subr.mxu0 0.0
    %1523 = vmatpush1.msra.mxu0 0.0
    %1524 = vmatprep.subr.mxu0 0.0
    %1525 = vmatpush1.msra.mxu0 0.0
    %1526 = vmatprep.subr.mxu0 0.0
    %1527 = vmatpush1.msra.mxu0 0.0
    %1528 = vmatprep.subr.mxu0 0.0
    %1529 = vmatpush1.msra.mxu0 0.0
    %1530 = vmatprep.subr.mxu0 0.0
    %1531 = vmatpush1.msra.mxu0 0.0
    %1532 = vmatprep.subr.mxu0 0.0
    %1533 = vmatpush1.msra.mxu0 0.0
    %1534 = vmatprep.subr.mxu0 0.0
    %1535 = vmatpush1.msra.mxu0 0.0
    %1536 = vmatprep.subr.mxu0 0.0
    %1537 = vmatpush1.msra.mxu0 0.0
    %1538 = vmatprep.subr.mxu0 0.0
    %1539 = vmatpush1.msra.mxu0 0.0
    %1540 = vmatprep.subr.mxu0 0.0
    %1541 = vmatpush1.msra.mxu0 0.0
    %1542 = vmatprep.subr.mxu0 0.0
    %1543 = vmatpush1.msra.mxu0 0.0
    %1544 = vmatprep.subr.mxu0 0.0
    %1545 = vmatpush1.msra.mxu0 0.0
    %1546 = vmatprep.subr.mxu0 0.0
    %1547 = vmatpush1.msra.mxu0 0.0
    %1548 = vmatprep.subr.mxu0 0.0
    %1549 = vmatpush1.msra.mxu0 0.0
    %1550 = vmatprep.subr.mxu0 0.0
    %1551 = vmatpush1.msra.mxu0 0.0
    %1552 = vmatprep.subr.mxu0 0.0
    %1553 = vmatpush1.msra.mxu0 0.0
    %1554 = vmatprep.subr.mxu0 0.0
    %1555 = vmatpush1.msra.mxu0 0.0
    %1556 = vmatprep.subr.mxu0 0.0
    %1557 = vmatpush1.msra.mxu0 0.0
    %1558 = vmatprep.subr.mxu0 0.0
    %1559 = vmatpush1.msra.mxu0 0.0
    %1560 = vmatprep.subr.mxu0 0.0
    %1561 = vmatpush1.msra.mxu0 0.0
    %1562 = vmatprep.subr.mxu0 0.0
    %1563 = vmatpush1.msra.mxu0 0.0
    %1564 = vmatprep.subr.mxu0 0.0
    %1565 = vmatpush1.msra.mxu0 0.0
    %1566 = vmatprep.subr.mxu0 0.0
    %1567 = vmatpush1.msra.mxu0 0.0
    %1568 = vmatprep.subr.mxu0 0.0
    %1569 = vmatpush1.msra.mxu0 0.0
    %1570 = vmatprep.subr.mxu0 0.0
    %1571 = vmatpush1.msra.mxu0 0.0
    %1572 = vmatprep.subr.mxu0 0.0
    %1573 = vmatpush1.msra.mxu0 0.0
    %1574 = vmatprep.mubr.f32.mxu0 0.0
    %1575 = vmatmul.mubr.f32.gmra.mrb[0].mxu0 %v1508
    %v1576 = vpop.f32.mrb[0].mxu0
    %v1577 = vadd.f32 0.0, %v1576
    %v1578 = vpop.f32.mrb[0].mxu0
    %v1579 = vadd.f32 0.0, %v1578
    %1580 = vdwg.mxu0
    %1582 = vrot.lane.b32.xlu0 %v1479, 32
    %v1583 = vpop.permute.xlu0 %1582
    %v1584 = vsel %vm291, %v1583, 0
    %1586 = vmatprep.subr.mxu0 0.0
    %1587 = vmatpush1.msra.mxu0 %v259
    %1588 = vmatprep.subr.mxu0 0.0
    %1589 = vmatpush1.msra.mxu0 %v260
    %1590 = vmatprep.subr.mxu0 0.0
    %1591 = vmatpush1.msra.mxu0 %v261
    %1592 = vmatprep.subr.mxu0 0.0
    %1593 = vmatpush1.msra.mxu0 %v262
    %1594 = vmatprep.subr.mxu0 0.0
    %1595 = vmatpush1.msra.mxu0 0.0
    %1596 = vmatprep.subr.mxu0 0.0
    %1597 = vmatpush1.msra.mxu0 0.0
    %1598 = vmatprep.subr.mxu0 0.0
    %1599 = vmatpush1.msra.mxu0 0.0
    %1600 = vmatprep.subr.mxu0 0.0
    %1601 = vmatpush1.msra.mxu0 0.0
    %1602 = vmatprep.subr.mxu0 0.0
    %1603 = vmatpush1.msra.mxu0 0.0
    %1604 = vmatprep.subr.mxu0 0.0
    %1605 = vmatpush1.msra.mxu0 0.0
    %1606 = vmatprep.subr.mxu0 0.0
    %1607 = vmatpush1.msra.mxu0 0.0
    %1608 = vmatprep.subr.mxu0 0.0
    %1609 = vmatpush1.msra.mxu0 0.0
    %1610 = vmatprep.subr.mxu0 0.0
    %1611 = vmatpush1.msra.mxu0 0.0
    %1612 = vmatprep.subr.mxu0 0.0
    %1613 = vmatpush1.msra.mxu0 0.0
    %1614 = vmatprep.subr.mxu0 0.0
    %1615 = vmatpush1.msra.mxu0 0.0
    %1616 = vmatprep.subr.mxu0 0.0
    %1617 = vmatpush1.msra.mxu0 0.0
    %1618 = vmatprep.subr.mxu0 0.0
    %1619 = vmatpush1.msra.mxu0 0.0
    %1620 = vmatprep.subr.mxu0 0.0
    %1621 = vmatpush1.msra.mxu0 0.0
    %1622 = vmatprep.subr.mxu0 0.0
    %1623 = vmatpush1.msra.mxu0 0.0
    %1624 = vmatprep.subr.mxu0 0.0
    %1625 = vmatpush1.msra.mxu0 0.0
    %1626 = vmatprep.subr.mxu0 0.0
    %1627 = vmatpush1.msra.mxu0 0.0
    %1628 = vmatprep.subr.mxu0 0.0
    %1629 = vmatpush1.msra.mxu0 0.0
    %1630 = vmatprep.subr.mxu0 0.0
    %1631 = vmatpush1.msra.mxu0 0.0
    %1632 = vmatprep.subr.mxu0 0.0
    %1633 = vmatpush1.msra.mxu0 0.0
    %1634 = vmatprep.subr.mxu0 0.0
    %1635 = vmatpush1.msra.mxu0 0.0
    %1636 = vmatprep.subr.mxu0 0.0
    %1637 = vmatpush1.msra.mxu0 0.0
    %1638 = vmatprep.subr.mxu0 0.0
    %1639 = vmatpush1.msra.mxu0 0.0
    %1640 = vmatprep.subr.mxu0 0.0
    %1641 = vmatpush1.msra.mxu0 0.0
    %1642 = vmatprep.subr.mxu0 0.0
    %1643 = vmatpush1.msra.mxu0 0.0
    %1644 = vmatprep.subr.mxu0 0.0
    %1645 = vmatpush1.msra.mxu0 0.0
    %1646 = vmatprep.subr.mxu0 0.0
    %1647 = vmatpush1.msra.mxu0 0.0
    %1648 = vmatprep.subr.mxu0 0.0
    %1649 = vmatpush1.msra.mxu0 0.0
    %1650 = vmatprep.mubr.f32.mxu0 0.0
    %1651 = vmatmul.mubr.f32.gmra.mrb[0].mxu0 %v1584
    %v1652 = vpop.f32.mrb[0].mxu0
    %v1653 = vadd.f32 0.0, %v1652
    %v1654 = vpop.f32.mrb[0].mxu0
    %1655 = vdwg.mxu0
    %v1656 = vadd.f32 %v1579, %v1653
    %v1657 = vadd.f32 %v1656, %v443
    %v1658 = vxor.u32 %v1657, 2147483648
    %v1659 = vmul.f32 %v1658, 1.442695
    %v1660 = vpow.pop %v1659
    %v1661 = vadd.f32 %v1660, 1.0
    %v1662 = vrcp.pop %v1661
    %v1663 = vmul.f32 1.0, %v1662
    %v1664 = vtanh.pop %v1657
    %v1665 = vmul.f32 %v1663, %v1473
    %1667 = vrot.lane.b32.xlu0 %v1664, 64
    %v1668 = vpop.permute.xlu0 %1667
    %v1670 = vmul.f32 %v1663, %v1668
    %1672 = vrot.lane.b32.xlu0 %v1670, 32
    %v1673 = vpop.permute.xlu0 %1672
    %v1675 = vadd.f32 %v1665, %v1673
    %v1676 = vtanh.pop %v1675
    %1678 = vrot.lane.b32.xlu0 %v1676, 64
    %v1679 = vpop.permute.xlu0 %1678
    %v1681 = vmul.f32 %v1663, %v1679
    %v1682 = vadd.f32 %v248, %v1577
    %v1683 = vxor.u32 %v1682, 2147483648
    %v1684 = vmul.f32 %v1683, 1.442695
    %v1685 = vpow.pop %v1684
    %v1686 = vadd.f32 %v1685, 1.0
    %v1687 = vrcp.pop %v1686
    %v1688 = vmul.f32 1.0, %v1687
    %v1689 = vtanh.pop %v1682
    %v1690 = vmul.f32 %v1688, %v1498
    %1692 = vrot.lane.b32.xlu0 %v1689, 64
    %v1693 = vpop.permute.xlu0 %1692
    %v1695 = vmul.f32 %v1688, %v1693
    %1697 = vrot.lane.b32.xlu0 %v1695, 32
    %v1698 = vpop.permute.xlu0 %1697
    %v1700 = vadd.f32 %v1690, %v1698
    %v1701 = vtanh.pop %v1700
    %1703 = vrot.lane.b32.xlu0 %v1701, 64
    %v1704 = vpop.permute.xlu0 %1703
    %v1706 = vmul.f32 %v1688, %v1704
    %1708 = vrot.lane.b32.xlu0 %v1706, 32
    %v1709 = vpop.permute.xlu0 %1708
    %v1710 = vsel %vm291, %v1709, 0
    %1712 = vmatprep.subr.mxu0 %v252
    %1713 = vmatpush1.msra.mxu0 %v251
    %1714 = vmatprep.subr.mxu0 %v254
    %1715 = vmatpush1.msra.mxu0 %v253
    %1716 = vmatprep.subr.mxu0 %v256
    %1717 = vmatpush1.msra.mxu0 %v255
    %1718 = vmatprep.subr.mxu0 %v258
    %1719 = vmatpush1.msra.mxu0 %v257
    %1720 = vmatprep.subr.mxu0 0.0
    %1721 = vmatpush1.msra.mxu0 0.0
    %1722 = vmatprep.subr.mxu0 0.0
    %1723 = vmatpush1.msra.mxu0 0.0
    %1724 = vmatprep.subr.mxu0 0.0
    %1725 = vmatpush1.msra.mxu0 0.0
    %1726 = vmatprep.subr.mxu0 0.0
    %1727 = vmatpush1.msra.mxu0 0.0
    %1728 = vmatprep.subr.mxu0 0.0
    %1729 = vmatpush1.msra.mxu0 0.0
    %1730 = vmatprep.subr.mxu0 0.0
    %1731 = vmatpush1.msra.mxu0 0.0
    %1732 = vmatprep.subr.mxu0 0.0
    %1733 = vmatpush1.msra.mxu0 0.0
    %1734 = vmatprep.subr.mxu0 0.0
    %1735 = vmatpush1.msra.mxu0 0.0
    %1736 = vmatprep.subr.mxu0 0.0
    %1737 = vmatpush1.msra.mxu0 0.0
    %1738 = vmatprep.subr.mxu0 0.0
    %1739 = vmatpush1.msra.mxu0 0.0
    %1740 = vmatprep.subr.mxu0 0.0
    %1741 = vmatpush1.msra.mxu0 0.0
    %1742 = vmatprep.subr.mxu0 0.0
    %1743 = vmatpush1.msra.mxu0 0.0
    %1744 = vmatprep.subr.mxu0 0.0
    %1745 = vmatpush1.msra.mxu0 0.0
    %1746 = vmatprep.subr.mxu0 0.0
    %1747 = vmatpush1.msra.mxu0 0.0
    %1748 = vmatprep.subr.mxu0 0.0
    %1749 = vmatpush1.msra.mxu0 0.0
    %1750 = vmatprep.subr.mxu0 0.0
    %1751 = vmatpush1.msra.mxu0 0.0
    %1752 = vmatprep.subr.mxu0 0.0
    %1753 = vmatpush1.msra.mxu0 0.0
    %1754 = vmatprep.subr.mxu0 0.0
    %1755 = vmatpush1.msra.mxu0 0.0
    %1756 = vmatprep.subr.mxu0 0.0
    %1757 = vmatpush1.msra.mxu0 0.0
    %1758 = vmatprep.subr.mxu0 0.0
    %1759 = vmatpush1.msra.mxu0 0.0
    %1760 = vmatprep.subr.mxu0 0.0
    %1761 = vmatpush1.msra.mxu0 0.0
    %1762 = vmatprep.subr.mxu0 0.0
    %1763 = vmatpush1.msra.mxu0 0.0
    %1764 = vmatprep.subr.mxu0 0.0
    %1765 = vmatpush1.msra.mxu0 0.0
    %1766 = vmatprep.subr.mxu0 0.0
    %1767 = vmatpush1.msra.mxu0 0.0
    %1768 = vmatprep.subr.mxu0 0.0
    %1769 = vmatpush1.msra.mxu0 0.0
    %1770 = vmatprep.subr.mxu0 0.0
    %1771 = vmatpush1.msra.mxu0 0.0
    %1772 = vmatprep.subr.mxu0 0.0
    %1773 = vmatpush1.msra.mxu0 0.0
    %1774 = vmatprep.subr.mxu0 0.0
    %1775 = vmatpush1.msra.mxu0 0.0
    %1776 = vmatprep.mubr.f32.mxu0 0.0
    %1777 = vmatmul.mubr.f32.gmra.mrb[0].mxu0 %v1710
    %v1778 = vpop.f32.mrb[0].mxu0
    %v1779 = vpop.f32.mrb[0].mxu0
    %v1780 = vadd.f32 0.0, %v1779
    %1781 = vdwg.mxu0
    %1783 = vrot.lane.b32.xlu0 %v1681, 32
    %v1784 = vpop.permute.xlu0 %1783
    %v1785 = vsel %vm291, %v1784, 0
    %1787 = vmatprep.subr.mxu0 0.0
    %1788 = vmatpush1.msra.mxu0 %v259
    %1789 = vmatprep.subr.mxu0 0.0
    %1790 = vmatpush1.msra.mxu0 %v260
    %1791 = vmatprep.subr.mxu0 0.0
    %1792 = vmatpush1.msra.mxu0 %v261
    %1793 = vmatprep.subr.mxu0 0.0
    %1794 = vmatpush1.msra.mxu0 %v262
    %1795 = vmatprep.subr.mxu0 0.0
    %1796 = vmatpush1.msra.mxu0 0.0
    %1797 = vmatprep.subr.mxu0 0.0
    %1798 = vmatpush1.msra.mxu0 0.0
    %1799 = vmatprep.subr.mxu0 0.0
    %1800 = vmatpush1.msra.mxu0 0.0
    %1801 = vmatprep.subr.mxu0 0.0
    %1802 = vmatpush1.msra.mxu0 0.0
    %1803 = vmatprep.subr.mxu0 0.0
    %1804 = vmatpush1.msra.mxu0 0.0
    %1805 = vmatprep.subr.mxu0 0.0
    %1806 = vmatpush1.msra.mxu0 0.0
    %1807 = vmatprep.subr.mxu0 0.0
    %1808 = vmatpush1.msra.mxu0 0.0
    %1809 = vmatprep.subr.mxu0 0.0
    %1810 = vmatpush1.msra.mxu0 0.0
    %1811 = vmatprep.subr.mxu0 0.0
    %1812 = vmatpush1.msra.mxu0 0.0
    %1813 = vmatprep.subr.mxu0 0.0
    %1814 = vmatpush1.msra.mxu0 0.0
    %1815 = vmatprep.subr.mxu0 0.0
    %1816 = vmatpush1.msra.mxu0 0.0
    %1817 = vmatprep.subr.mxu0 0.0
    %1818 = vmatpush1.msra.mxu0 0.0
    %1819 = vmatprep.subr.mxu0 0.0
    %1820 = vmatpush1.msra.mxu0 0.0
    %1821 = vmatprep.subr.mxu0 0.0
    %1822 = vmatpush1.msra.mxu0 0.0
    %1823 = vmatprep.subr.mxu0 0.0
    %1824 = vmatpush1.msra.mxu0 0.0
    %1825 = vmatprep.subr.mxu0 0.0
    %1826 = vmatpush1.msra.mxu0 0.0
    %1827 = vmatprep.subr.mxu0 0.0
    %1828 = vmatpush1.msra.mxu0 0.0
    %1829 = vmatprep.subr.mxu0 0.0
    %1830 = vmatpush1.msra.mxu0 0.0
    %1831 = vmatprep.subr.mxu0 0.0
    %1832 = vmatpush1.msra.mxu0 0.0
    %1833 = vmatprep.subr.mxu0 0.0
    %1834 = vmatpush1.msra.mxu0 0.0
    %1835 = vmatprep.subr.mxu0 0.0
    %1836 = vmatpush1.msra.mxu0 0.0
    %1837 = vmatprep.subr.mxu0 0.0
    %1838 = vmatpush1.msra.mxu0 0.0
    %1839 = vmatprep.subr.mxu0 0.0
    %1840 = vmatpush1.msra.mxu0 0.0
    %1841 = vmatprep.subr.mxu0 0.0
    %1842 = vmatpush1.msra.mxu0 0.0
    %1843 = vmatprep.subr.mxu0 0.0
    %1844 = vmatpush1.msra.mxu0 0.0
    %1845 = vmatprep.subr.mxu0 0.0
    %1846 = vmatpush1.msra.mxu0 0.0
    %1847 = vmatprep.subr.mxu0 0.0
    %1848 = vmatpush1.msra.mxu0 0.0
    %1849 = vmatprep.subr.mxu0 0.0
    %1850 = vmatpush1.msra.mxu0 0.0
    %1851 = vmatprep.mubr.f32.mxu0 0.0
    %1852 = vmatmul.mubr.f32.gmra.mrb[0].mxu0 %v1785
    %v1853 = vpop.f32.mrb[0].mxu0
    %v1854 = vadd.f32 0.0, %v1853
    %v1855 = vpop.f32.mrb[0].mxu0
    %1856 = vdwg.mxu0
    %v1857 = vadd.f32 %v1780, %v1854
    %v1858 = vadd.f32 %v1857, %v443
    %v1859 = vxor.u32 %v1858, 2147483648
    %v1860 = vmul.f32 %v1859, 1.442695
    %v1861 = vpow.pop %v1860
    %v1862 = vadd.f32 %v1861, 1.0
    %v1863 = vrcp.pop %v1862
    %v1864 = vmul.f32 1.0, %v1863
    %v1865 = vtanh.pop %v1858
    %v1866 = vmul.f32 %v1864, %v1675
    %1868 = vrot.lane.b32.xlu0 %v1865, 64
    %v1869 = vpop.permute.xlu0 %1868
    %v1871 = vmul.f32 %v1864, %v1869
    %1873 = vrot.lane.b32.xlu0 %v1871, 32
    %v1874 = vpop.permute.xlu0 %1873
    %v1876 = vadd.f32 %v1866, %v1874
    %v1877 = vtanh.pop %v1876
    %1879 = vrot.lane.b32.xlu0 %v1877, 64
    %v1880 = vpop.permute.xlu0 %1879
    %v1882 = vmul.f32 %v1864, %v1880
    %v1883 = vld [vmem:[#allocation10] sm:$0xff]
    %v1884 = vld [vmem:[#allocation10 + $0x8] sm:$0xff]
    %v1885 = vld [vmem:[#allocation10 + $0x10] sm:$0xff]
    %v1886 = vld [vmem:[#allocation10 + $0x18] sm:$0xff]
    %v1887 = vld [vmem:[%s7] sm:$0x1]
    %v1889 = vlaneseq
    %v1890 = vshrl.u32 %v1889, 7
    %v1891 = vsub.s32 0, %v1890
    %v1892 = vrot.slane %v1887, %v1891
    %1895 = vrot.lane.b32.xlu0 %v1882, 32
    %v1896 = vpop.permute.xlu0 %1895
    %v1897 = vsel %vm291, %v1896, 0
    %1899 = vmatprep.subr.mxu0 0.0
    %1900 = vmatpush1.msra.mxu0 %v1883
    %1901 = vmatprep.subr.mxu0 0.0
    %1902 = vmatpush1.msra.mxu0 %v1884
    %1903 = vmatprep.subr.mxu0 0.0
    %1904 = vmatpush1.msra.mxu0 %v1885
    %1905 = vmatprep.subr.mxu0 0.0
    %1906 = vmatpush1.msra.mxu0 %v1886
    %1907 = vmatprep.subr.mxu0 0.0
    %1908 = vmatpush1.msra.mxu0 0.0
    %1909 = vmatprep.subr.mxu0 0.0
    %1910 = vmatpush1.msra.mxu0 0.0
    %1911 = vmatprep.subr.mxu0 0.0
    %1912 = vmatpush1.msra.mxu0 0.0
    %1913 = vmatprep.subr.mxu0 0.0
    %1914 = vmatpush1.msra.mxu0 0.0
    %1915 = vmatprep.subr.mxu0 0.0
    %1916 = vmatpush1.msra.mxu0 0.0
    %1917 = vmatprep.subr.mxu0 0.0
    %1918 = vmatpush1.msra.mxu0 0.0
    %1919 = vmatprep.subr.mxu0 0.0
    %1920 = vmatpush1.msra.mxu0 0.0
    %1921 = vmatprep.subr.mxu0 0.0
    %1922 = vmatpush1.msra.mxu0 0.0
    %1923 = vmatprep.subr.mxu0 0.0
    %1924 = vmatpush1.msra.mxu0 0.0
    %1925 = vmatprep.subr.mxu0 0.0
    %1926 = vmatpush1.msra.mxu0 0.0
    %1927 = vmatprep.subr.mxu0 0.0
    %1928 = vmatpush1.msra.mxu0 0.0
    %1929 = vmatprep.subr.mxu0 0.0
    %1930 = vmatpush1.msra.mxu0 0.0
    %1931 = vmatprep.subr.mxu0 0.0
    %1932 = vmatpush1.msra.mxu0 0.0
    %1933 = vmatprep.subr.mxu0 0.0
    %1934 = vmatpush1.msra.mxu0 0.0
    %1935 = vmatprep.subr.mxu0 0.0
    %1936 = vmatpush1.msra.mxu0 0.0
    %1937 = vmatprep.subr.mxu0 0.0
    %1938 = vmatpush1.msra.mxu0 0.0
    %1939 = vmatprep.subr.mxu0 0.0
    %1940 = vmatpush1.msra.mxu0 0.0
    %1941 = vmatprep.subr.mxu0 0.0
    %1942 = vmatpush1.msra.mxu0 0.0
    %1943 = vmatprep.subr.mxu0 0.0
    %1944 = vmatpush1.msra.mxu0 0.0
    %1945 = vmatprep.subr.mxu0 0.0
    %1946 = vmatpush1.msra.mxu0 0.0
    %1947 = vmatprep.subr.mxu0 0.0
    %1948 = vmatpush1.msra.mxu0 0.0
    %1949 = vmatprep.subr.mxu0 0.0
    %1950 = vmatpush1.msra.mxu0 0.0
    %1951 = vmatprep.subr.mxu0 0.0
    %1952 = vmatpush1.msra.mxu0 0.0
    %1953 = vmatprep.subr.mxu0 0.0
    %1954 = vmatpush1.msra.mxu0 0.0
    %1955 = vmatprep.subr.mxu0 0.0
    %1956 = vmatpush1.msra.mxu0 0.0
    %1957 = vmatprep.subr.mxu0 0.0
    %1958 = vmatpush1.msra.mxu0 0.0
    %1959 = vmatprep.subr.mxu0 0.0
    %1960 = vmatpush1.msra.mxu0 0.0
    %1961 = vmatprep.subr.mxu0 0.0
    %1962 = vmatpush1.msra.mxu0 0.0
    %1963 = vmatprep.mubr.f32.mxu0 0.0
    %1964 = vmatmul.mubr.f32.gmra.mrb[0].mxu0 %v1897
    %v1965 = vpop.f32.mrb[0].mxu0
    %v1966 = vadd.f32 %v1892, %v1965
    %v1967 = vpop.f32.mrb[0].mxu0
    %1968 = vdwg.mxu0
    %1969 = vst [vmem:[#allocation11] sm:$0xff] %v1966
    // Predicated region
    $region54: #{tpu_custom_call.1} parent=1 // pred_check
      _
    $region55: #{tpu_custom_call.1} parent=1 // pred_check_branch
      %1971 = sbr.rel (0) target = $region57
    $region56: #{tpu_custom_call.1} parent=1 // pred_region
      %s1973 = ssub.s32 128, 128
      %1974 = vsyncadd [#allocation4], %s1973
      %s1976 = sshll.u32 [#allocation11], 4
      %s1977 = int_to_ptr.vmem [resolvable:$true] %s1976
      %1979 = dma.vmem_to_hbm [thread:$0]  %s1977, 128, %s8, [#allocation4]
    $region57: #{tpu_custom_call.1} parent=1 // pred_fallthru
      _
    // Predicated region
    $region58: #{tpu_custom_call.1} parent=1 // pred_check
      _
    $region59: #{tpu_custom_call.1} parent=1 // pred_check_branch
      %1981 = sbr.rel (0) target = $region61
    $region60: #{tpu_custom_call.1} parent=1 // pred_region
      %1982 = dma.done [#allocation4], 128
    $region61: #{tpu_custom_call.1} parent=1 // pred_fallthru
      _
    %1983 = vsyncpa [#allocation3], 1
    %1984 = vsyncpa [#allocation6], 1
    %1985 = vsyncpa [#allocation9], 1
    %1986 = vsyncpa [#allocation4], 1

</llo_original>
